<compile_context>
chip_gen: v7x
topology: tpu7x:2x2x1
jax: 0.10.0
libtpu: 0.0.40
codegen_flags: <defaults>
</compile_context>

<pallas_src>
import functools

import jax
import jax.numpy as jnp
from jax.experimental import pallas as pl
from jax.experimental.pallas import tpu as pltpu

# Layer sizes (only the input features are padded; H3 stays 64).
F_IN_RAW, F_IN = 5, 8        # input features padded 5 -> 8
ONES_ROW = F_IN_RAW          # xt row / w1 column carrying the folded b1
H1, H2, H3 = 512, 256, 64

COMPUTE_DTYPE = jnp.bfloat16          # MXU input dtype; accumulation is f32
_VMEM_LIMIT = 48 * 1024 * 1024        # above all scoped defaults, < v7x 64 MiB


def price_mlp_kernel(x_ref, w1_ref, w2_ref, b2_ref, w3_ref, b3_ref,
                     w4_ref, b4_ref, out_ref, *, act_dtype):
    """Fused 4-layer MLP on one (F_IN, tile_b) batch tile (batch on lanes)."""
    x = x_ref[...]                                                # (8, TB) bf16
    # Layer 1 (bias folded into w1[:, ONES_ROW]): (512, 8) @ (8, TB).
    h = jnp.dot(w1_ref[...], x, preferred_element_type=jnp.float32)
    h = jnp.maximum(h.astype(act_dtype), 0.0).astype(COMPUTE_DTYPE)
    # Layer 2 (dominant): (256, 512) @ (512, TB).
    h = jnp.dot(w2_ref[...], h, preferred_element_type=jnp.float32)
    h = jnp.maximum(h.astype(act_dtype) + b2_ref[...].astype(act_dtype),
                    0.0).astype(COMPUTE_DTYPE)
    # Layer 3: (64, 256) @ (256, TB)  -- H3 kept at 64, no padding.
    h = jnp.dot(w3_ref[...], h, preferred_element_type=jnp.float32)
    h = jnp.maximum(h.astype(act_dtype) + b3_ref[...].astype(act_dtype),
                    0.0).astype(COMPUTE_DTYPE)
    # Layer 4: (1, 64) @ (64, TB) -> lane-dense (1, TB) row; f32 bias add.
    y = jnp.dot(w4_ref[...], h, preferred_element_type=jnp.float32)
    out_ref[...] = (y + b4_ref[...]).astype(out_ref.dtype)


@functools.partial(jax.jit, static_argnames=("tile_b", "bf16_epilogue"))
def price_mlp_forward(x, prepared_params, tile_b=2048, bf16_epilogue=True):
    """x: (B, 5) f32 -> (B, 1) f32.

    tile_b: batch-tile width on the lane axis (multiple of 256 recommended).
      1024-4096 amortizes the ~0.35 us per-grid-step overhead; on v7x keep
      tile_b <= 4096 and B/tile_b >= 2 so both TensorCores get work.
    bf16_epilogue: bias+ReLU in bf16 (recommended on v6e/v7x which have a
      bf16 VALU); set False on v5e to keep the f32 epilogue.
    """
    w1, w2, b2, w3, b3, w4, b4 = prepared_params
    B = x.shape[0]
    # Cap the tile at the (256-rounded) batch so tiny batches stay cheap.
    tile_b = max(256, min(tile_b, pl.cdiv(B, 256) * 256))
    num_tiles = pl.cdiv(B, tile_b)
    B_pad = num_tiles * tile_b

    # Layout plumbing in bf16: pad features 5->8 with a constant-1 row at
    # ONES_ROW (folds b1 into layer 1), pad batch to a multiple of tile_b,
    # and put the batch on the lane axis.
    xt = jnp.zeros((F_IN, B_pad), COMPUTE_DTYPE)
    xt = xt.at[ONES_ROW, :].set(1.0)
    xt = xt.at[:F_IN_RAW, :B].set(x.astype(COMPUTE_DTYPE).T)

    def const_block(a):
        # Whole array, same block every grid step -> VMEM-resident constant.
        # (pipeline_mode=pl.Buffered(1) would also drop the redundant second
        #  buffer; omitted since the saving is <1 MiB of VMEM.)
        nd = a.ndim
        return pl.BlockSpec(a.shape, lambda i: (0,) * nd)

    act_dtype = COMPUTE_DTYPE if bf16_epilogue else jnp.float32
    kernel = functools.partial(price_mlp_kernel, act_dtype=act_dtype)

    flops = 2 * B_pad * (F_IN * H1 + H1 * H2 + H2 * H3 + H3 * 1)
    bytes_accessed = (xt.size * xt.dtype.itemsize
                      + sum(p.size * p.dtype.itemsize for p in prepared_params)
                      + B_pad * 4)

    out = pl.pallas_call(
        kernel,
        out_shape=jax.ShapeDtypeStruct((1, B_pad), jnp.float32),
        grid_spec=pltpu.PrefetchScalarGridSpec(
            num_scalar_prefetch=0,
            grid=(num_tiles,),
            in_specs=[
                pl.BlockSpec((F_IN, tile_b), lambda i: (0, i)),   # x batch tile
                const_block(w1),
                const_block(w2), const_block(b2),
                const_block(w3), const_block(b3),
                const_block(w4), const_block(b4),
            ],
            out_specs=pl.BlockSpec((1, tile_b), lambda i: (0, i)),
        ),
        compiler_params=pltpu.CompilerParams(
            dimension_semantics=("parallel",),
            vmem_limit_bytes=_VMEM_LIMIT),
        cost_estimate=pl.CostEstimate(
            flops=flops, transcendentals=0, bytes_accessed=bytes_accessed),
    )(xt, w1, w2, b2, w3, b3, w4, b4)

    return out[0, :B, None]                                       # (B, 1)


def init_torch_style_params(key):
    """nn.Linear-style params: w (out, in), b (out,), U(+-1/sqrt(fan_in))."""
    dims = [(F_IN_RAW, H1), (H1, H2), (H2, H3), (H3, 1)]
    params = []
    for fan_in, fan_out in dims:
        key, kw, kb = jax.random.split(key, 3)
        bound = 1.0 / jnp.sqrt(fan_in)
        w = jax.random.uniform(kw, (fan_out, fan_in), jnp.float32, -bound, bound)
        b = jax.random.uniform(kb, (fan_out,), jnp.float32, -bound, bound)
        params.append((w, b))
    return params


def prepare_params(torch_params):
    """Pad/fold to TPU-friendly shapes; cast matmul weights to bf16.

    w1: (512,5) -> (512,8) with b1 folded into column ONES_ROW (=5) and
    columns 6-7 zero.  b2/b3/b4 become f32 (out, 1) columns (cast to the
    epilogue dtype inside the kernel).  Padding is all zeros, so the forward
    pass is numerically unchanged (modulo bf16 rounding of weights/biases).
    """
    (w1, b1), (w2, b2), (w3, b3), (w4, b4) = torch_params
    w1p = jnp.zeros((H1, F_IN), jnp.float32)
    w1p = w1p.at[:, :F_IN_RAW].set(w1)
    w1p = w1p.at[:, ONES_ROW].set(b1)

    def col(b):
        return b.reshape(-1, 1).astype(jnp.float32)

    return (w1p.astype(COMPUTE_DTYPE),
            w2.astype(COMPUTE_DTYPE), col(b2),
            w3.astype(COMPUTE_DTYPE), col(b3),
            w4.astype(COMPUTE_DTYPE), col(b4))


def reference_forward(x, torch_params, bf16_epilogue=True):
    """Pure-jnp reference mirroring the kernel numerics (bf16 matmul inputs,
    f32 accumulation, folded bf16 layer-1 bias, chosen epilogue dtype)."""
    (w1, b1), (w2, b2), (w3, b3), (w4, b4) = torch_params
    act = COMPUTE_DTYPE if bf16_epilogue else jnp.float32
    h = jnp.dot(x.astype(COMPUTE_DTYPE), w1.T.astype(COMPUTE_DTYPE),
                preferred_element_type=jnp.float32)
    h = h + b1.astype(COMPUTE_DTYPE).astype(jnp.float32)   # folded bf16 bias
    h = jnp.maximum(h.astype(act), 0.0).astype(COMPUTE_DTYPE)
    for w, b in ((w2, b2), (w3, b3)):
        h = jnp.dot(h, w.T.astype(COMPUTE_DTYPE),
                    preferred_element_type=jnp.float32)
        h = jnp.maximum(h.astype(act) + b.astype(act), 0.0).astype(COMPUTE_DTYPE)
    y = jnp.dot(h, w4.T.astype(COMPUTE_DTYPE),
                preferred_element_type=jnp.float32)
    return y + b4


if __name__ == "__main__":
    key = jax.random.PRNGKey(0)
    kx, kp = jax.random.split(key)

    B = 10  # small, non-multiple of 256 -> exercises the batch-padding path
    x = jax.random.normal(kx, (B, F_IN_RAW), jnp.float32)

    torch_params = init_torch_style_params(kp)
    prepared = prepare_params(torch_params)

    # bf16 epilogue path (recommended on v6e/v7x).
    out = jax.block_until_ready(price_mlp_forward(x, prepared))
    ref = reference_forward(x, torch_params, bf16_epilogue=True)
    assert out.shape == (B, 1)
    err = jnp.max(jnp.abs(out - ref))
    # bf16 intermediates -> compare at bf16-ulp-level tolerance.
    assert jnp.allclose(out, ref, atol=1e-2, rtol=1e-2), \
        f"bf16-epilogue mismatch, max err {err}"

    # f32 epilogue path (v5e) -- tight tolerance vs. the mirrored reference.
    out32 = jax.block_until_ready(
        price_mlp_forward(x, prepared, tile_b=256, bf16_epilogue=False))
    ref32 = reference_forward(x, torch_params, bf16_epilogue=False)
    err32 = jnp.max(jnp.abs(out32 - ref32))
    assert jnp.allclose(out32, ref32, atol=1e-3, rtol=1e-3), \
        f"f32-epilogue mismatch, max err {err32}"

    print("KERNEL_OK")
</pallas_src>

<mosaic_0001>
module attributes {stable_mosaic.version = 11 : i64} {
  func.func @price_mlp_kernel(%arg0: i32, %arg1: memref<8x256xbf16, #tpu.memory_space<vmem>>, %arg2: memref<512x8xbf16, #tpu.memory_space<vmem>>, %arg3: memref<256x512xbf16, #tpu.memory_space<vmem>>, %arg4: memref<256x1xf32, #tpu.memory_space<vmem>>, %arg5: memref<64x256xbf16, #tpu.memory_space<vmem>>, %arg6: memref<64x1xf32, #tpu.memory_space<vmem>>, %arg7: memref<1x64xbf16, #tpu.memory_space<vmem>>, %arg8: memref<1x1xf32, #tpu.memory_space<vmem>>, %arg9: memref<1x256xf32, #tpu.memory_space<vmem>>) attributes {dimension_semantics = [#tpu.dimension_semantics<parallel>], iteration_bounds = array<i64: 1>, scalar_prefetch = 0 : i64, scratch_operands = 0 : i64, tpu.core_type = #tpu.core_type<tc>, window_params = [{transform_indices = @transform_0, window_bounds = array<i64: 8, 256>}, {pipeline_mode = #tpu.pipeline_mode<synchronous>, transform_indices = @transform_1, window_bounds = array<i64: 512, 8>}, {pipeline_mode = #tpu.pipeline_mode<synchronous>, transform_indices = @transform_2, window_bounds = array<i64: 256, 512>}, {pipeline_mode = #tpu.pipeline_mode<synchronous>, transform_indices = @transform_3, window_bounds = array<i64: 256, 1>}, {pipeline_mode = #tpu.pipeline_mode<synchronous>, transform_indices = @transform_4, window_bounds = array<i64: 64, 256>}, {pipeline_mode = #tpu.pipeline_mode<synchronous>, transform_indices = @transform_5, window_bounds = array<i64: 64, 1>}, {pipeline_mode = #tpu.pipeline_mode<synchronous>, transform_indices = @transform_6, window_bounds = array<i64: 1, 64>}, {pipeline_mode = #tpu.pipeline_mode<synchronous>, transform_indices = @transform_7, window_bounds = array<i64: 1, 1>}, {transform_indices = @transform_8, window_bounds = array<i64: 1, 256>}]} {
    %c0 = arith.constant 0 : index
    %c0_0 = arith.constant 0 : index
    %0 = vector.load %arg1[%c0, %c0_0] : memref<8x256xbf16, #tpu.memory_space<vmem>>, vector<8x256xbf16>
    %c0_1 = arith.constant 0 : index
    %c0_2 = arith.constant 0 : index
    %1 = vector.load %arg2[%c0_1, %c0_2] : memref<512x8xbf16, #tpu.memory_space<vmem>>, vector<512x8xbf16>
    %cst = arith.constant dense<0.000000e+00> : vector<512x256xf32>
    %2 = tpu.matmul %1, %0, %cst {dimension_numbers = #tpu.dot_dimension_numbers<[1], [0], [0], [1], [0, 0, 1, 1], [], []>} : vector<512x8xbf16>, vector<8x256xbf16>, vector<512x256xf32> -> vector<512x256xf32>
    %3 = arith.truncf %2 : vector<512x256xf32> to vector<512x256xbf16>
    %cst_3 = arith.constant 0.000000e+00 : bf16
    %4 = vector.broadcast %cst_3 : bf16 to vector<512x256xbf16>
    %5 = arith.maximumf %3, %4 : vector<512x256xbf16>
    %c0_4 = arith.constant 0 : index
    %c0_5 = arith.constant 0 : index
    %6 = vector.load %arg3[%c0_4, %c0_5] : memref<256x512xbf16, #tpu.memory_space<vmem>>, vector<256x512xbf16>
    %cst_6 = arith.constant dense<0.000000e+00> : vector<256x256xf32>
    %7 = tpu.matmul %6, %5, %cst_6 {dimension_numbers = #tpu.dot_dimension_numbers<[1], [0], [0], [1], [0, 0, 1, 1], [], []>} : vector<256x512xbf16>, vector<512x256xbf16>, vector<256x256xf32> -> vector<256x256xf32>
    %8 = arith.truncf %7 : vector<256x256xf32> to vector<256x256xbf16>
    %c0_7 = arith.constant 0 : index
    %c0_8 = arith.constant 0 : index
    %9 = vector.load %arg4[%c0_7, %c0_8] : memref<256x1xf32, #tpu.memory_space<vmem>>, vector<256x1xf32>
    %10 = arith.truncf %9 : vector<256x1xf32> to vector<256x1xbf16>
    %11 = vector.broadcast %10 : vector<256x1xbf16> to vector<256x256xbf16>
    %12 = arith.addf %8, %11 : vector<256x256xbf16>
    %cst_9 = arith.constant 0.000000e+00 : bf16
    %13 = vector.broadcast %cst_9 : bf16 to vector<256x256xbf16>
    %14 = arith.maximumf %12, %13 : vector<256x256xbf16>
    %c0_10 = arith.constant 0 : index
    %c0_11 = arith.constant 0 : index
    %15 = vector.load %arg5[%c0_10, %c0_11] : memref<64x256xbf16, #tpu.memory_space<vmem>>, vector<64x256xbf16>
    %cst_12 = arith.constant dense<0.000000e+00> : vector<64x256xf32>
    %16 = tpu.matmul %15, %14, %cst_12 {dimension_numbers = #tpu.dot_dimension_numbers<[1], [0], [0], [1], [0, 0, 1, 1], [], []>} : vector<64x256xbf16>, vector<256x256xbf16>, vector<64x256xf32> -> vector<64x256xf32>
    %17 = arith.truncf %16 : vector<64x256xf32> to vector<64x256xbf16>
    %c0_13 = arith.constant 0 : index
    %c0_14 = arith.constant 0 : index
    %18 = vector.load %arg6[%c0_13, %c0_14] : memref<64x1xf32, #tpu.memory_space<vmem>>, vector<64x1xf32>
    %19 = arith.truncf %18 : vector<64x1xf32> to vector<64x1xbf16>
    %20 = vector.broadcast %19 : vector<64x1xbf16> to vector<64x256xbf16>
    %21 = arith.addf %17, %20 : vector<64x256xbf16>
    %cst_15 = arith.constant 0.000000e+00 : bf16
    %22 = vector.broadcast %cst_15 : bf16 to vector<64x256xbf16>
    %23 = arith.maximumf %21, %22 : vector<64x256xbf16>
    %c0_16 = arith.constant 0 : index
    %c0_17 = arith.constant 0 : index
    %24 = vector.load %arg7[%c0_16, %c0_17] : memref<1x64xbf16, #tpu.memory_space<vmem>>, vector<1x64xbf16>
    %cst_18 = arith.constant dense<0.000000e+00> : vector<1x256xf32>
    %25 = tpu.matmul %24, %23, %cst_18 {dimension_numbers = #tpu.dot_dimension_numbers<[1], [0], [0], [1], [0, 0, 1, 1], [], []>} : vector<1x64xbf16>, vector<64x256xbf16>, vector<1x256xf32> -> vector<1x256xf32>
    %c0_19 = arith.constant 0 : index
    %c0_20 = arith.constant 0 : index
    %26 = vector.load %arg8[%c0_19, %c0_20] : memref<1x1xf32, #tpu.memory_space<vmem>>, vector<1x1xf32>
    %27 = vector.broadcast %26 : vector<1x1xf32> to vector<1x256xf32>
    %28 = arith.addf %25, %27 : vector<1x256xf32>
    %c0_21 = arith.constant 0 : index
    %c0_22 = arith.constant 0 : index
    %29 = vector.load %arg9[%c0_21, %c0_22] : memref<1x256xf32, #tpu.memory_space<vmem>>, vector<1x256xf32>
    tpu.vector_store %arg9[%c0_21, %c0_22], %28 {strides = array<i32>} : memref<1x256xf32, #tpu.memory_space<vmem>>, vector<1x256xf32>,
    return
  }
  func.func @transform_0(%arg0: i32) -> (i32, i32) {
    %c0_i32 = arith.constant 0 : i32
    %c0_i32_0 = arith.constant 0 : i32
    return %c0_i32, %arg0 : i32, i32
  }
  func.func @transform_1(%arg0: i32) -> (i32, i32) {
    %c0_i32 = arith.constant 0 : i32
    %c0_i32_0 = arith.constant 0 : i32
    %c0_i32_1 = arith.constant 0 : i32
    return %c0_i32, %c0_i32_0 : i32, i32
  }
  func.func @transform_2(%arg0: i32) -> (i32, i32) {
    %c0_i32 = arith.constant 0 : i32
    %c0_i32_0 = arith.constant 0 : i32
    %c0_i32_1 = arith.constant 0 : i32
    return %c0_i32, %c0_i32_0 : i32, i32
  }
  func.func @transform_3(%arg0: i32) -> (i32, i32) {
    %c0_i32 = arith.constant 0 : i32
    %c0_i32_0 = arith.constant 0 : i32
    %c0_i32_1 = arith.constant 0 : i32
    return %c0_i32, %c0_i32_0 : i32, i32
  }
  func.func @transform_4(%arg0: i32) -> (i32, i32) {
    %c0_i32 = arith.constant 0 : i32
    %c0_i32_0 = arith.constant 0 : i32
    %c0_i32_1 = arith.constant 0 : i32
    return %c0_i32, %c0_i32_0 : i32, i32
  }
  func.func @transform_5(%arg0: i32) -> (i32, i32) {
    %c0_i32 = arith.constant 0 : i32
    %c0_i32_0 = arith.constant 0 : i32
    %c0_i32_1 = arith.constant 0 : i32
    return %c0_i32, %c0_i32_0 : i32, i32
  }
  func.func @transform_6(%arg0: i32) -> (i32, i32) {
    %c0_i32 = arith.constant 0 : i32
    %c0_i32_0 = arith.constant 0 : i32
    %c0_i32_1 = arith.constant 0 : i32
    return %c0_i32, %c0_i32_0 : i32, i32
  }
  func.func @transform_7(%arg0: i32) -> (i32, i32) {
    %c0_i32 = arith.constant 0 : i32
    %c0_i32_0 = arith.constant 0 : i32
    %c0_i32_1 = arith.constant 0 : i32
    return %c0_i32, %c0_i32_0 : i32, i32
  }
  func.func @transform_8(%arg0: i32) -> (i32, i32) {
    %c0_i32 = arith.constant 0 : i32
    %c0_i32_0 = arith.constant 0 : i32
    return %c0_i32, %arg0 : i32, i32
  }
}

</mosaic_0001>

<llo_original>
// kernel: price_mlp_forward.1
$region0: #{price_mlp_forward.1}
  #allocation0 [shape = 'u32[]', space=smem, size = 0x4, offset = 0x4, fixed_abs, tag = 'smem constant byte address 0x4 - core index']
  #allocation1 [shape = 'u32[144,128]{1,0:T(1,128)}', space=vmem, size = 0x12000, scoped, tag = 'internal scratch']
  #allocation2 [shape = 'f32[1,1]{1,0:T(1,128)S(1)}', space=vmem, size = 0x200, scoped, tag = 'scoped memory for price_mlp_forward.1']
  %s0 = inlined_call_operand.vmem [shape: bf16[8,256], index: 0, kind: input, shape index: {}]
  %s1 = inlined_call_operand.vmem [shape: bf16[512,8], index: 1, kind: input, shape index: {}]
  %s2 = inlined_call_operand.vmem [shape: bf16[256,512], index: 2, kind: input, shape index: {}]
  %s3 = inlined_call_operand.vmem [shape: f32[256,1], index: 3, kind: input, shape index: {}]
  %s4 = inlined_call_operand.vmem [shape: bf16[64,256], index: 4, kind: input, shape index: {}]
  %s5 = inlined_call_operand.vmem [shape: f32[64,1], index: 5, kind: input, shape index: {}]
  %s6 = inlined_call_operand.vmem [shape: bf16[1,64], index: 6, kind: input, shape index: {}]
  %s7 = inlined_call_operand.<no memory space> [shape: f32[1,1], index: 7, kind: input, shape index: {}]
  %s8 = inlined_call_operand.vmem [shape: f32[1,256], index: 8, kind: output, shape index: {}]
  %s9 = sld [smem:[#allocation0]]
  $region42: #{price_mlp_forward.1} parent=0
    _
  %s11 = ssub.s32 1, %s9
  %s12 = scalar_select 0, %s11, %s9
  %v13 = vstv %s7
  %14 = vst [vmem:[#allocation2] sm:$0x1] %v13
  // Predicated region
  $region2: #{price_mlp_forward.1} parent=0 // pred_check
    _
  $region3: #{price_mlp_forward.1} parent=0 // pred_check_branch
    %16 = sbr.rel (0) target = $region5
  $region4: #{price_mlp_forward.1} parent=0 // pred_region
    _
  $region5: #{price_mlp_forward.1} parent=0 // pred_fallthru
    _
  // Predicated region
  $region6: #{price_mlp_forward.1} parent=0 // pred_check
    _
  $region7: #{price_mlp_forward.1} parent=0 // pred_check_branch
    %18 = sbr.rel (0) target = $region9
  $region8: #{price_mlp_forward.1} parent=0 // pred_region
    _
  $region9: #{price_mlp_forward.1} parent=0 // pred_fallthru
    _
  // Predicated region
  $region10: #{price_mlp_forward.1} parent=0 // pred_check
    _
  $region11: #{price_mlp_forward.1} parent=0 // pred_check_branch
    %20 = sbr.rel (0) target = $region13
  $region12: #{price_mlp_forward.1} parent=0 // pred_region
    _
  $region13: #{price_mlp_forward.1} parent=0 // pred_fallthru
    _
  // Predicated region
  $region14: #{price_mlp_forward.1} parent=0 // pred_check
    _
  $region15: #{price_mlp_forward.1} parent=0 // pred_check_branch
    %22 = sbr.rel (0) target = $region17
  $region16: #{price_mlp_forward.1} parent=0 // pred_region
    _
  $region17: #{price_mlp_forward.1} parent=0 // pred_fallthru
    _
  // Predicated region
  $region18: #{price_mlp_forward.1} parent=0 // pred_check
    _
  $region19: #{price_mlp_forward.1} parent=0 // pred_check_branch
    %24 = sbr.rel (0) target = $region21
  $region20: #{price_mlp_forward.1} parent=0 // pred_region
    _
  $region21: #{price_mlp_forward.1} parent=0 // pred_fallthru
    _
  // Predicated region
  $region22: #{price_mlp_forward.1} parent=0 // pred_check
    _
  $region23: #{price_mlp_forward.1} parent=0 // pred_check_branch
    %26 = sbr.rel (0) target = $region25
  $region24: #{price_mlp_forward.1} parent=0 // pred_region
    _
  $region25: #{price_mlp_forward.1} parent=0 // pred_fallthru
    _
  // Predicated region
  $region26: #{price_mlp_forward.1} parent=0 // pred_check
    _
  $region27: #{price_mlp_forward.1} parent=0 // pred_check_branch
    %28 = sbr.rel (0) target = $region29
  $region28: #{price_mlp_forward.1} parent=0 // pred_region
    _
  $region29: #{price_mlp_forward.1} parent=0 // pred_fallthru
    _
  // Predicated region
  $region30: #{price_mlp_forward.1} parent=0 // pred_check
    _
  $region31: #{price_mlp_forward.1} parent=0 // pred_check_branch
    %30 = sbr.rel (0) target = $region33
  $region32: #{price_mlp_forward.1} parent=0 // pred_region
    _
  $region33: #{price_mlp_forward.1} parent=0 // pred_fallthru
    _
  %v32 = vld [vmem:[%s0] sm:$0xff]
  %v33 = vld [vmem:[%s1] sm:$0xf]
  %v34 = vld [vmem:[%s1 + $0x4] sm:$0xf]
  %v35 = vld [vmem:[%s1 + $0x8] sm:$0xf]
  %v36 = vld [vmem:[%s1 + $0xc] sm:$0xf]
  %v37 = vld [vmem:[%s1 + $0x10] sm:$0xf]
  %v38 = vld [vmem:[%s1 + $0x14] sm:$0xf]
  %v39 = vld [vmem:[%s1 + $0x18] sm:$0xf]
  %v40 = vld [vmem:[%s1 + $0x1c] sm:$0xf]
  %v41 = vld [vmem:[%s1 + $0x20] sm:$0xf]
  %v42 = vld [vmem:[%s1 + $0x24] sm:$0xf]
  %v43 = vld [vmem:[%s1 + $0x28] sm:$0xf]
  %v44 = vld [vmem:[%s1 + $0x2c] sm:$0xf]
  %v45 = vld [vmem:[%s1 + $0x30] sm:$0xf]
  %v46 = vld [vmem:[%s1 + $0x34] sm:$0xf]
  %v47 = vld [vmem:[%s1 + $0x38] sm:$0xf]
  %v48 = vld [vmem:[%s1 + $0x3c] sm:$0xf]
  %v49 = vld [vmem:[%s1 + $0x40] sm:$0xf]
  %v50 = vld [vmem:[%s1 + $0x44] sm:$0xf]
  %v51 = vld [vmem:[%s1 + $0x48] sm:$0xf]
  %v52 = vld [vmem:[%s1 + $0x4c] sm:$0xf]
  %v53 = vld [vmem:[%s1 + $0x50] sm:$0xf]
  %v54 = vld [vmem:[%s1 + $0x54] sm:$0xf]
  %v55 = vld [vmem:[%s1 + $0x58] sm:$0xf]
  %v56 = vld [vmem:[%s1 + $0x5c] sm:$0xf]
  %v57 = vld [vmem:[%s1 + $0x60] sm:$0xf]
  %v58 = vld [vmem:[%s1 + $0x64] sm:$0xf]
  %v59 = vld [vmem:[%s1 + $0x68] sm:$0xf]
  %v60 = vld [vmem:[%s1 + $0x6c] sm:$0xf]
  %v61 = vld [vmem:[%s1 + $0x70] sm:$0xf]
  %v62 = vld [vmem:[%s1 + $0x74] sm:$0xf]
  %v63 = vld [vmem:[%s1 + $0x78] sm:$0xf]
  %v64 = vld [vmem:[%s1 + $0x7c] sm:$0xf]
  %v65 = vld [vmem:[%s1 + $0x80] sm:$0xf]
  %v66 = vld [vmem:[%s1 + $0x84] sm:$0xf]
  %v67 = vld [vmem:[%s1 + $0x88] sm:$0xf]
  %v68 = vld [vmem:[%s1 + $0x8c] sm:$0xf]
  %v69 = vld [vmem:[%s1 + $0x90] sm:$0xf]
  %v70 = vld [vmem:[%s1 + $0x94] sm:$0xf]
  %v71 = vld [vmem:[%s1 + $0x98] sm:$0xf]
  %v72 = vld [vmem:[%s1 + $0x9c] sm:$0xf]
  %v73 = vld [vmem:[%s1 + $0xa0] sm:$0xf]
  %v74 = vld [vmem:[%s1 + $0xa4] sm:$0xf]
  %v75 = vld [vmem:[%s1 + $0xa8] sm:$0xf]
  %v76 = vld [vmem:[%s1 + $0xac] sm:$0xf]
  %v77 = vld [vmem:[%s1 + $0xb0] sm:$0xf]
  %v78 = vld [vmem:[%s1 + $0xb4] sm:$0xf]
  %v79 = vld [vmem:[%s1 + $0xb8] sm:$0xf]
  %v80 = vld [vmem:[%s1 + $0xbc] sm:$0xf]
  %v81 = vld [vmem:[%s1 + $0xc0] sm:$0xf]
  %v82 = vld [vmem:[%s1 + $0xc4] sm:$0xf]
  %v83 = vld [vmem:[%s1 + $0xc8] sm:$0xf]
  %v84 = vld [vmem:[%s1 + $0xcc] sm:$0xf]
  %v85 = vld [vmem:[%s1 + $0xd0] sm:$0xf]
  %v86 = vld [vmem:[%s1 + $0xd4] sm:$0xf]
  %v87 = vld [vmem:[%s1 + $0xd8] sm:$0xf]
  %v88 = vld [vmem:[%s1 + $0xdc] sm:$0xf]
  %v89 = vld [vmem:[%s1 + $0xe0] sm:$0xf]
  %v90 = vld [vmem:[%s1 + $0xe4] sm:$0xf]
  %v91 = vld [vmem:[%s1 + $0xe8] sm:$0xf]
  %v92 = vld [vmem:[%s1 + $0xec] sm:$0xf]
  %v93 = vld [vmem:[%s1 + $0xf0] sm:$0xf]
  %v94 = vld [vmem:[%s1 + $0xf4] sm:$0xf]
  %v95 = vld [vmem:[%s1 + $0xf8] sm:$0xf]
  %v96 = vld [vmem:[%s1 + $0xfc] sm:$0xf]
  %v161 = vunpack.c.l.b16 %v33
  %v162 = vunpack.c.l.b16 %v34
  %v163 = vunpack.c.l.b16 %v35
  %v164 = vunpack.c.l.b16 %v36
  %v165 = vunpack.c.l.b16 %v37
  %v166 = vunpack.c.l.b16 %v38
  %v167 = vunpack.c.l.b16 %v39
  %v168 = vunpack.c.l.b16 %v40
  %v169 = vunpack.c.l.b16 %v41
  %v170 = vunpack.c.l.b16 %v42
  %v171 = vunpack.c.l.b16 %v43
  %v172 = vunpack.c.l.b16 %v44
  %v173 = vunpack.c.l.b16 %v45
  %v174 = vunpack.c.l.b16 %v46
  %v175 = vunpack.c.l.b16 %v47
  %v176 = vunpack.c.l.b16 %v48
  %v177 = vunpack.c.l.b16 %v49
  %v178 = vunpack.c.l.b16 %v50
  %v179 = vunpack.c.l.b16 %v51
  %v180 = vunpack.c.l.b16 %v52
  %v181 = vunpack.c.l.b16 %v53
  %v182 = vunpack.c.l.b16 %v54
  %v183 = vunpack.c.l.b16 %v55
  %v184 = vunpack.c.l.b16 %v56
  %v185 = vunpack.c.l.b16 %v57
  %v186 = vunpack.c.l.b16 %v58
  %v187 = vunpack.c.l.b16 %v59
  %v188 = vunpack.c.l.b16 %v60
  %v189 = vunpack.c.l.b16 %v61
  %v190 = vunpack.c.l.b16 %v62
  %v191 = vunpack.c.l.b16 %v63
  %v192 = vunpack.c.l.b16 %v64
  %v193 = vunpack.c.l.b16 %v65
  %v194 = vunpack.c.l.b16 %v66
  %v195 = vunpack.c.l.b16 %v67
  %v196 = vunpack.c.l.b16 %v68
  %v197 = vunpack.c.l.b16 %v69
  %v198 = vunpack.c.l.b16 %v70
  %v199 = vunpack.c.l.b16 %v71
  %v200 = vunpack.c.l.b16 %v72
  %v201 = vunpack.c.l.b16 %v73
  %v202 = vunpack.c.l.b16 %v74
  %v203 = vunpack.c.l.b16 %v75
  %v204 = vunpack.c.l.b16 %v76
  %v205 = vunpack.c.l.b16 %v77
  %v206 = vunpack.c.l.b16 %v78
  %v207 = vunpack.c.l.b16 %v79
  %v208 = vunpack.c.l.b16 %v80
  %v209 = vunpack.c.l.b16 %v81
  %v210 = vunpack.c.l.b16 %v82
  %v211 = vunpack.c.l.b16 %v83
  %v212 = vunpack.c.l.b16 %v84
  %v213 = vunpack.c.l.b16 %v85
  %v214 = vunpack.c.l.b16 %v86
  %v215 = vunpack.c.l.b16 %v87
  %v216 = vunpack.c.l.b16 %v88
  %v217 = vunpack.c.l.b16 %v89
  %v218 = vunpack.c.l.b16 %v90
  %v219 = vunpack.c.l.b16 %v91
  %v220 = vunpack.c.l.b16 %v92
  %v221 = vunpack.c.l.b16 %v93
  %v222 = vunpack.c.l.b16 %v94
  %v223 = vunpack.c.l.b16 %v95
  %v224 = vunpack.c.l.b16 %v96
  %v225 = vpack.c.b16 %v162, %v161
  %v226 = vpack.c.b16 %v164, %v163
  %v227 = vpack.c.b16 %v166, %v165
  %v228 = vpack.c.b16 %v168, %v167
  %v229 = vpack.c.b16 %v170, %v169
  %v230 = vpack.c.b16 %v172, %v171
  %v231 = vpack.c.b16 %v174, %v173
  %v232 = vpack.c.b16 %v176, %v175
  %v233 = vpack.c.b16 %v178, %v177
  %v234 = vpack.c.b16 %v180, %v179
  %v235 = vpack.c.b16 %v182, %v181
  %v236 = vpack.c.b16 %v184, %v183
  %v237 = vpack.c.b16 %v186, %v185
  %v238 = vpack.c.b16 %v188, %v187
  %v239 = vpack.c.b16 %v190, %v189
  %v240 = vpack.c.b16 %v192, %v191
  %v241 = vpack.c.b16 %v194, %v193
  %v242 = vpack.c.b16 %v196, %v195
  %v243 = vpack.c.b16 %v198, %v197
  %v244 = vpack.c.b16 %v200, %v199
  %v245 = vpack.c.b16 %v202, %v201
  %v246 = vpack.c.b16 %v204, %v203
  %v247 = vpack.c.b16 %v206, %v205
  %v248 = vpack.c.b16 %v208, %v207
  %v249 = vpack.c.b16 %v210, %v209
  %v250 = vpack.c.b16 %v212, %v211
  %v251 = vpack.c.b16 %v214, %v213
  %v252 = vpack.c.b16 %v216, %v215
  %v253 = vpack.c.b16 %v218, %v217
  %v254 = vpack.c.b16 %v220, %v219
  %v255 = vpack.c.b16 %v222, %v221
  %v256 = vpack.c.b16 %v224, %v223
  %v258 = vunpack.c.l.b16 %v32
  %v259 = vunpack.c.h.b16 %v32
  %v260 = vpack.c.b16 %v258, %v258
  %v261 = vpack.c.b16 %v259, %v259
  %vm262 = vcmask 64512
  %v264 = vsel %vm262, %v225, 0
  %v267 = vsel %vm262, %v226, 0
  %v270 = vsel %vm262, %v227, 0
  %v273 = vsel %vm262, %v228, 0
  %v276 = vsel %vm262, %v229, 0
  %v279 = vsel %vm262, %v230, 0
  %v282 = vsel %vm262, %v231, 0
  %v285 = vsel %vm262, %v232, 0
  %v288 = vsel %vm262, %v233, 0
  %v291 = vsel %vm262, %v234, 0
  %v294 = vsel %vm262, %v235, 0
  %v297 = vsel %vm262, %v236, 0
  %v300 = vsel %vm262, %v237, 0
  %v303 = vsel %vm262, %v238, 0
  %v306 = vsel %vm262, %v239, 0
  %v309 = vsel %vm262, %v240, 0
  %v312 = vsel %vm262, %v241, 0
  %v315 = vsel %vm262, %v242, 0
  %v318 = vsel %vm262, %v243, 0
  %v321 = vsel %vm262, %v244, 0
  %v324 = vsel %vm262, %v245, 0
  %v327 = vsel %vm262, %v246, 0
  %v330 = vsel %vm262, %v247, 0
  %v333 = vsel %vm262, %v248, 0
  %v336 = vsel %vm262, %v249, 0
  %v339 = vsel %vm262, %v250, 0
  %v342 = vsel %vm262, %v251, 0
  %v345 = vsel %vm262, %v252, 0
  %v348 = vsel %vm262, %v253, 0
  %v351 = vsel %vm262, %v254, 0
  %v354 = vsel %vm262, %v255, 0
  %v357 = vsel %vm262, %v256, 0
  %vm359 = vcmask 1043456
  %v361 = vsel %vm359, %v260, 0
  %v364 = vsel %vm359, %v261, 0
  %366 = vmatprep.subr.bf16.mxu0 %v364
  %367 = vmatpush1.bf16.msra.mxu0 %v361
  %368 = vmatprep.subr.bf16.mxu0 0
  %369 = vmatpush1.bf16.msra.mxu0 0
  %370 = vmatprep.subr.bf16.mxu0 0
  %371 = vmatpush1.bf16.msra.mxu0 0
  %372 = vmatprep.subr.bf16.mxu0 0
  %373 = vmatpush1.bf16.msra.mxu0 0
  %374 = vmatprep.subr.bf16.mxu0 0
  %375 = vmatpush1.bf16.msra.mxu0 0
  %376 = vmatprep.subr.bf16.mxu0 0
  %377 = vmatpush1.bf16.msra.mxu0 0
  %378 = vmatprep.subr.bf16.mxu0 0
  %379 = vmatpush1.bf16.msra.mxu0 0
  %380 = vmatprep.subr.bf16.mxu0 0
  %381 = vmatpush1.bf16.msra.mxu0 0
  %382 = vmatprep.subr.bf16.mxu0 0
  %383 = vmatpush1.bf16.msra.mxu0 0
  %384 = vmatprep.subr.bf16.mxu0 0
  %385 = vmatpush1.bf16.msra.mxu0 0
  %386 = vmatprep.subr.bf16.mxu0 0
  %387 = vmatpush1.bf16.msra.mxu0 0
  %388 = vmatprep.subr.bf16.mxu0 0
  %389 = vmatpush1.bf16.msra.mxu0 0
  %390 = vmatprep.subr.bf16.mxu0 0
  %391 = vmatpush1.bf16.msra.mxu0 0
  %392 = vmatprep.subr.bf16.mxu0 0
  %393 = vmatpush1.bf16.msra.mxu0 0
  %394 = vmatprep.subr.bf16.mxu0 0
  %395 = vmatpush1.bf16.msra.mxu0 0
  %396 = vmatprep.subr.bf16.mxu0 0
  %397 = vmatpush1.bf16.msra.mxu0 0
  %398 = vmatprep.mubr.bf16.mxu0 0
  %399 = vmatmul.mubr.bf16.gmra.mrb[0].mxu0 %v264
  %v400 = vpop.f32.mrb[0].mxu0
  %v401 = vadd.f32 0.0, %v400
  %v402 = vpop.f32.mrb[0].mxu0
  %v403 = vadd.f32 0.0, %v402
  %v404 = vpop.f32.mrb[0].mxu0
  %v405 = vadd.f32 0.0, %v404
  %v406 = vpop.f32.mrb[0].mxu0
  %v407 = vadd.f32 0.0, %v406
  %408 = vmatprep.mubr.bf16.mxu0 0
  %409 = vmatmul.mubr.bf16.gmra.mrb[0].mxu0 %v267
  %v410 = vpop.f32.mrb[0].mxu0
  %v411 = vadd.f32 0.0, %v410
  %v412 = vpop.f32.mrb[0].mxu0
  %v413 = vadd.f32 0.0, %v412
  %v414 = vpop.f32.mrb[0].mxu0
  %v415 = vadd.f32 0.0, %v414
  %v416 = vpop.f32.mrb[0].mxu0
  %v417 = vadd.f32 0.0, %v416
  %418 = vmatprep.mubr.bf16.mxu0 0
  %419 = vmatmul.mubr.bf16.gmra.mrb[0].mxu0 %v270
  %v420 = vpop.f32.mrb[0].mxu0
  %v421 = vadd.f32 0.0, %v420
  %v422 = vpop.f32.mrb[0].mxu0
  %v423 = vadd.f32 0.0, %v422
  %v424 = vpop.f32.mrb[0].mxu0
  %v425 = vadd.f32 0.0, %v424
  %v426 = vpop.f32.mrb[0].mxu0
  %v427 = vadd.f32 0.0, %v426
  %428 = vmatprep.mubr.bf16.mxu0 0
  %429 = vmatmul.mubr.bf16.gmra.mrb[0].mxu0 %v273
  %v430 = vpop.f32.mrb[0].mxu0
  %v431 = vadd.f32 0.0, %v430
  %v432 = vpop.f32.mrb[0].mxu0
  %v433 = vadd.f32 0.0, %v432
  %v434 = vpop.f32.mrb[0].mxu0
  %v435 = vadd.f32 0.0, %v434
  %v436 = vpop.f32.mrb[0].mxu0
  %v437 = vadd.f32 0.0, %v436
  %438 = vmatprep.mubr.bf16.mxu0 0
  %439 = vmatmul.mubr.bf16.gmra.mrb[0].mxu0 %v276
  %v440 = vpop.f32.mrb[0].mxu0
  %v441 = vadd.f32 0.0, %v440
  %v442 = vpop.f32.mrb[0].mxu0
  %v443 = vadd.f32 0.0, %v442
  %v444 = vpop.f32.mrb[0].mxu0
  %v445 = vadd.f32 0.0, %v444
  %v446 = vpop.f32.mrb[0].mxu0
  %v447 = vadd.f32 0.0, %v446
  %448 = vmatprep.mubr.bf16.mxu0 0
  %449 = vmatmul.mubr.bf16.gmra.mrb[0].mxu0 %v279
  %v450 = vpop.f32.mrb[0].mxu0
  %v451 = vadd.f32 0.0, %v450
  %v452 = vpop.f32.mrb[0].mxu0
  %v453 = vadd.f32 0.0, %v452
  %v454 = vpop.f32.mrb[0].mxu0
  %v455 = vadd.f32 0.0, %v454
  %v456 = vpop.f32.mrb[0].mxu0
  %v457 = vadd.f32 0.0, %v456
  %458 = vmatprep.mubr.bf16.mxu0 0
  %459 = vmatmul.mubr.bf16.gmra.mrb[0].mxu0 %v282
  %v460 = vpop.f32.mrb[0].mxu0
  %v461 = vadd.f32 0.0, %v460
  %v462 = vpop.f32.mrb[0].mxu0
  %v463 = vadd.f32 0.0, %v462
  %v464 = vpop.f32.mrb[0].mxu0
  %v465 = vadd.f32 0.0, %v464
  %v466 = vpop.f32.mrb[0].mxu0
  %v467 = vadd.f32 0.0, %v466
  %468 = vmatprep.mubr.bf16.mxu0 0
  %469 = vmatmul.mubr.bf16.gmra.mrb[0].mxu0 %v285
  %v470 = vpop.f32.mrb[0].mxu0
  %v471 = vadd.f32 0.0, %v470
  %v472 = vpop.f32.mrb[0].mxu0
  %v473 = vadd.f32 0.0, %v472
  %v474 = vpop.f32.mrb[0].mxu0
  %v475 = vadd.f32 0.0, %v474
  %v476 = vpop.f32.mrb[0].mxu0
  %v477 = vadd.f32 0.0, %v476
  %478 = vmatprep.mubr.bf16.mxu0 0
  %479 = vmatmul.mubr.bf16.gmra.mrb[0].mxu0 %v288
  %v480 = vpop.f32.mrb[0].mxu0
  %v481 = vadd.f32 0.0, %v480
  %v482 = vpop.f32.mrb[0].mxu0
  %v483 = vadd.f32 0.0, %v482
  %v484 = vpop.f32.mrb[0].mxu0
  %v485 = vadd.f32 0.0, %v484
  %v486 = vpop.f32.mrb[0].mxu0
  %v487 = vadd.f32 0.0, %v486
  %488 = vmatprep.mubr.bf16.mxu0 0
  %489 = vmatmul.mubr.bf16.gmra.mrb[0].mxu0 %v291
  %v490 = vpop.f32.mrb[0].mxu0
  %v491 = vadd.f32 0.0, %v490
  %v492 = vpop.f32.mrb[0].mxu0
  %v493 = vadd.f32 0.0, %v492
  %v494 = vpop.f32.mrb[0].mxu0
  %v495 = vadd.f32 0.0, %v494
  %v496 = vpop.f32.mrb[0].mxu0
  %v497 = vadd.f32 0.0, %v496
  %498 = vmatprep.mubr.bf16.mxu0 0
  %499 = vmatmul.mubr.bf16.gmra.mrb[0].mxu0 %v294
  %v500 = vpop.f32.mrb[0].mxu0
  %v501 = vadd.f32 0.0, %v500
  %v502 = vpop.f32.mrb[0].mxu0
  %v503 = vadd.f32 0.0, %v502
  %v504 = vpop.f32.mrb[0].mxu0
  %v505 = vadd.f32 0.0, %v504
  %v506 = vpop.f32.mrb[0].mxu0
  %v507 = vadd.f32 0.0, %v506
  %508 = vmatprep.mubr.bf16.mxu0 0
  %509 = vmatmul.mubr.bf16.gmra.mrb[0].mxu0 %v297
  %v510 = vpop.f32.mrb[0].mxu0
  %v511 = vadd.f32 0.0, %v510
  %v512 = vpop.f32.mrb[0].mxu0
  %v513 = vadd.f32 0.0, %v512
  %v514 = vpop.f32.mrb[0].mxu0
  %v515 = vadd.f32 0.0, %v514
  %v516 = vpop.f32.mrb[0].mxu0
  %v517 = vadd.f32 0.0, %v516
  %518 = vmatprep.mubr.bf16.mxu0 0
  %519 = vmatmul.mubr.bf16.gmra.mrb[0].mxu0 %v300
  %v520 = vpop.f32.mrb[0].mxu0
  %v521 = vadd.f32 0.0, %v520
  %v522 = vpop.f32.mrb[0].mxu0
  %v523 = vadd.f32 0.0, %v522
  %v524 = vpop.f32.mrb[0].mxu0
  %v525 = vadd.f32 0.0, %v524
  %v526 = vpop.f32.mrb[0].mxu0
  %v527 = vadd.f32 0.0, %v526
  %528 = vmatprep.mubr.bf16.mxu0 0
  %529 = vmatmul.mubr.bf16.gmra.mrb[0].mxu0 %v303
  %v530 = vpop.f32.mrb[0].mxu0
  %v531 = vadd.f32 0.0, %v530
  %v532 = vpop.f32.mrb[0].mxu0
  %v533 = vadd.f32 0.0, %v532
  %v534 = vpop.f32.mrb[0].mxu0
  %v535 = vadd.f32 0.0, %v534
  %v536 = vpop.f32.mrb[0].mxu0
  %v537 = vadd.f32 0.0, %v536
  %538 = vmatprep.mubr.bf16.mxu0 0
  %539 = vmatmul.mubr.bf16.gmra.mrb[0].mxu0 %v306
  %v540 = vpop.f32.mrb[0].mxu0
  %v541 = vadd.f32 0.0, %v540
  %v542 = vpop.f32.mrb[0].mxu0
  %v543 = vadd.f32 0.0, %v542
  %v544 = vpop.f32.mrb[0].mxu0
  %v545 = vadd.f32 0.0, %v544
  %v546 = vpop.f32.mrb[0].mxu0
  %v547 = vadd.f32 0.0, %v546
  %548 = vmatprep.mubr.bf16.mxu0 0
  %549 = vmatmul.mubr.bf16.gmra.mrb[0].mxu0 %v309
  %v550 = vpop.f32.mrb[0].mxu0
  %v551 = vadd.f32 0.0, %v550
  %v552 = vpop.f32.mrb[0].mxu0
  %v553 = vadd.f32 0.0, %v552
  %v554 = vpop.f32.mrb[0].mxu0
  %v555 = vadd.f32 0.0, %v554
  %v556 = vpop.f32.mrb[0].mxu0
  %v557 = vadd.f32 0.0, %v556
  %558 = vmatprep.mubr.bf16.mxu0 0
  %559 = vmatmul.mubr.bf16.gmra.mrb[0].mxu0 %v312
  %v560 = vpop.f32.mrb[0].mxu0
  %v561 = vadd.f32 0.0, %v560
  %v562 = vpop.f32.mrb[0].mxu0
  %v563 = vadd.f32 0.0, %v562
  %v564 = vpop.f32.mrb[0].mxu0
  %v565 = vadd.f32 0.0, %v564
  %v566 = vpop.f32.mrb[0].mxu0
  %v567 = vadd.f32 0.0, %v566
  %568 = vmatprep.mubr.bf16.mxu0 0
  %569 = vmatmul.mubr.bf16.gmra.mrb[0].mxu0 %v315
  %v570 = vpop.f32.mrb[0].mxu0
  %v571 = vadd.f32 0.0, %v570
  %v572 = vpop.f32.mrb[0].mxu0
  %v573 = vadd.f32 0.0, %v572
  %v574 = vpop.f32.mrb[0].mxu0
  %v575 = vadd.f32 0.0, %v574
  %v576 = vpop.f32.mrb[0].mxu0
  %v577 = vadd.f32 0.0, %v576
  %578 = vmatprep.mubr.bf16.mxu0 0
  %579 = vmatmul.mubr.bf16.gmra.mrb[0].mxu0 %v318
  %v580 = vpop.f32.mrb[0].mxu0
  %v581 = vadd.f32 0.0, %v580
  %v582 = vpop.f32.mrb[0].mxu0
  %v583 = vadd.f32 0.0, %v582
  %v584 = vpop.f32.mrb[0].mxu0
  %v585 = vadd.f32 0.0, %v584
  %v586 = vpop.f32.mrb[0].mxu0
  %v587 = vadd.f32 0.0, %v586
  %588 = vmatprep.mubr.bf16.mxu0 0
  %589 = vmatmul.mubr.bf16.gmra.mrb[0].mxu0 %v321
  %v590 = vpop.f32.mrb[0].mxu0
  %v591 = vadd.f32 0.0, %v590
  %v592 = vpop.f32.mrb[0].mxu0
  %v593 = vadd.f32 0.0, %v592
  %v594 = vpop.f32.mrb[0].mxu0
  %v595 = vadd.f32 0.0, %v594
  %v596 = vpop.f32.mrb[0].mxu0
  %v597 = vadd.f32 0.0, %v596
  %598 = vmatprep.mubr.bf16.mxu0 0
  %599 = vmatmul.mubr.bf16.gmra.mrb[0].mxu0 %v324
  %v600 = vpop.f32.mrb[0].mxu0
  %v601 = vadd.f32 0.0, %v600
  %v602 = vpop.f32.mrb[0].mxu0
  %v603 = vadd.f32 0.0, %v602
  %v604 = vpop.f32.mrb[0].mxu0
  %v605 = vadd.f32 0.0, %v604
  %v606 = vpop.f32.mrb[0].mxu0
  %v607 = vadd.f32 0.0, %v606
  %608 = vmatprep.mubr.bf16.mxu0 0
  %609 = vmatmul.mubr.bf16.gmra.mrb[0].mxu0 %v327
  %v610 = vpop.f32.mrb[0].mxu0
  %v611 = vadd.f32 0.0, %v610
  %v612 = vpop.f32.mrb[0].mxu0
  %v613 = vadd.f32 0.0, %v612
  %v614 = vpop.f32.mrb[0].mxu0
  %v615 = vadd.f32 0.0, %v614
  %v616 = vpop.f32.mrb[0].mxu0
  %v617 = vadd.f32 0.0, %v616
  %618 = vmatprep.mubr.bf16.mxu0 0
  %619 = vmatmul.mubr.bf16.gmra.mrb[0].mxu0 %v330
  %v620 = vpop.f32.mrb[0].mxu0
  %v621 = vadd.f32 0.0, %v620
  %v622 = vpop.f32.mrb[0].mxu0
  %v623 = vadd.f32 0.0, %v622
  %v624 = vpop.f32.mrb[0].mxu0
  %v625 = vadd.f32 0.0, %v624
  %v626 = vpop.f32.mrb[0].mxu0
  %v627 = vadd.f32 0.0, %v626
  %628 = vmatprep.mubr.bf16.mxu0 0
  %629 = vmatmul.mubr.bf16.gmra.mrb[0].mxu0 %v333
  %v630 = vpop.f32.mrb[0].mxu0
  %v631 = vadd.f32 0.0, %v630
  %v632 = vpop.f32.mrb[0].mxu0
  %v633 = vadd.f32 0.0, %v632
  %v634 = vpop.f32.mrb[0].mxu0
  %v635 = vadd.f32 0.0, %v634
  %v636 = vpop.f32.mrb[0].mxu0
  %v637 = vadd.f32 0.0, %v636
  %638 = vmatprep.mubr.bf16.mxu0 0
  %639 = vmatmul.mubr.bf16.gmra.mrb[0].mxu0 %v336
  %v640 = vpop.f32.mrb[0].mxu0
  %v641 = vadd.f32 0.0, %v640
  %v642 = vpop.f32.mrb[0].mxu0
  %v643 = vadd.f32 0.0, %v642
  %v644 = vpop.f32.mrb[0].mxu0
  %v645 = vadd.f32 0.0, %v644
  %v646 = vpop.f32.mrb[0].mxu0
  %v647 = vadd.f32 0.0, %v646
  %648 = vmatprep.mubr.bf16.mxu0 0
  %649 = vmatmul.mubr.bf16.gmra.mrb[0].mxu0 %v339
  %v650 = vpop.f32.mrb[0].mxu0
  %v651 = vadd.f32 0.0, %v650
  %v652 = vpop.f32.mrb[0].mxu0
  %v653 = vadd.f32 0.0, %v652
  %v654 = vpop.f32.mrb[0].mxu0
  %v655 = vadd.f32 0.0, %v654
  %v656 = vpop.f32.mrb[0].mxu0
  %v657 = vadd.f32 0.0, %v656
  %658 = vmatprep.mubr.bf16.mxu0 0
  %659 = vmatmul.mubr.bf16.gmra.mrb[0].mxu0 %v342
  %v660 = vpop.f32.mrb[0].mxu0
  %v661 = vadd.f32 0.0, %v660
  %v662 = vpop.f32.mrb[0].mxu0
  %v663 = vadd.f32 0.0, %v662
  %v664 = vpop.f32.mrb[0].mxu0
  %v665 = vadd.f32 0.0, %v664
  %v666 = vpop.f32.mrb[0].mxu0
  %v667 = vadd.f32 0.0, %v666
  %668 = vmatprep.mubr.bf16.mxu0 0
  %669 = vmatmul.mubr.bf16.gmra.mrb[0].mxu0 %v345
  %v670 = vpop.f32.mrb[0].mxu0
  %v671 = vadd.f32 0.0, %v670
  %v672 = vpop.f32.mrb[0].mxu0
  %v673 = vadd.f32 0.0, %v672
  %v674 = vpop.f32.mrb[0].mxu0
  %v675 = vadd.f32 0.0, %v674
  %v676 = vpop.f32.mrb[0].mxu0
  %v677 = vadd.f32 0.0, %v676
  %678 = vmatprep.mubr.bf16.mxu0 0
  %679 = vmatmul.mubr.bf16.gmra.mrb[0].mxu0 %v348
  %v680 = vpop.f32.mrb[0].mxu0
  %v681 = vadd.f32 0.0, %v680
  %v682 = vpop.f32.mrb[0].mxu0
  %v683 = vadd.f32 0.0, %v682
  %v684 = vpop.f32.mrb[0].mxu0
  %v685 = vadd.f32 0.0, %v684
  %v686 = vpop.f32.mrb[0].mxu0
  %v687 = vadd.f32 0.0, %v686
  %688 = vmatprep.mubr.bf16.mxu0 0
  %689 = vmatmul.mubr.bf16.gmra.mrb[0].mxu0 %v351
  %v690 = vpop.f32.mrb[0].mxu0
  %v691 = vadd.f32 0.0, %v690
  %v692 = vpop.f32.mrb[0].mxu0
  %v693 = vadd.f32 0.0, %v692
  %v694 = vpop.f32.mrb[0].mxu0
  %v695 = vadd.f32 0.0, %v694
  %v696 = vpop.f32.mrb[0].mxu0
  %v697 = vadd.f32 0.0, %v696
  %698 = vmatprep.mubr.bf16.mxu0 0
  %699 = vmatmul.mubr.bf16.gmra.mrb[0].mxu0 %v354
  %v700 = vpop.f32.mrb[0].mxu0
  %v701 = vadd.f32 0.0, %v700
  %v702 = vpop.f32.mrb[0].mxu0
  %v703 = vadd.f32 0.0, %v702
  %v704 = vpop.f32.mrb[0].mxu0
  %v705 = vadd.f32 0.0, %v704
  %v706 = vpop.f32.mrb[0].mxu0
  %v707 = vadd.f32 0.0, %v706
  %708 = vmatprep.mubr.bf16.mxu0 0
  %709 = vmatmul.mubr.bf16.gmra.mrb[0].mxu0 %v357
  %v710 = vpop.f32.mrb[0].mxu0
  %v711 = vadd.f32 0.0, %v710
  %v712 = vpop.f32.mrb[0].mxu0
  %v713 = vadd.f32 0.0, %v712
  %v714 = vpop.f32.mrb[0].mxu0
  %v715 = vadd.f32 0.0, %v714
  %v716 = vpop.f32.mrb[0].mxu0
  %v717 = vadd.f32 0.0, %v716
  %718 = vdwg.mxu0
  %v719 = vpack.c.bf16 %v405, %v401
  %v720 = vpack.c.bf16 %v407, %v403
  %v721 = vpack.c.bf16 %v415, %v411
  %v722 = vpack.c.bf16 %v417, %v413
  %v723 = vpack.c.bf16 %v425, %v421
  %v724 = vpack.c.bf16 %v427, %v423
  %v725 = vpack.c.bf16 %v435, %v431
  %v726 = vpack.c.bf16 %v437, %v433
  %v727 = vpack.c.bf16 %v445, %v441
  %v728 = vpack.c.bf16 %v447, %v443
  %v729 = vpack.c.bf16 %v455, %v451
  %v730 = vpack.c.bf16 %v457, %v453
  %v731 = vpack.c.bf16 %v465, %v461
  %v732 = vpack.c.bf16 %v467, %v463
  %v733 = vpack.c.bf16 %v475, %v471
  %v734 = vpack.c.bf16 %v477, %v473
  %v735 = vpack.c.bf16 %v485, %v481
  %v736 = vpack.c.bf16 %v487, %v483
  %v737 = vpack.c.bf16 %v495, %v491
  %v738 = vpack.c.bf16 %v497, %v493
  %v739 = vpack.c.bf16 %v505, %v501
  %v740 = vpack.c.bf16 %v507, %v503
  %v741 = vpack.c.bf16 %v515, %v511
  %v742 = vpack.c.bf16 %v517, %v513
  %v743 = vpack.c.bf16 %v525, %v521
  %v744 = vpack.c.bf16 %v527, %v523
  %v745 = vpack.c.bf16 %v535, %v531
  %v746 = vpack.c.bf16 %v537, %v533
  %v747 = vpack.c.bf16 %v545, %v541
  %v748 = vpack.c.bf16 %v547, %v543
  %v749 = vpack.c.bf16 %v555, %v551
  %v750 = vpack.c.bf16 %v557, %v553
  %v751 = vpack.c.bf16 %v565, %v561
  %v752 = vpack.c.bf16 %v567, %v563
  %v753 = vpack.c.bf16 %v575, %v571
  %v754 = vpack.c.bf16 %v577, %v573
  %v755 = vpack.c.bf16 %v585, %v581
  %v756 = vpack.c.bf16 %v587, %v583
  %v757 = vpack.c.bf16 %v595, %v591
  %v758 = vpack.c.bf16 %v597, %v593
  %v759 = vpack.c.bf16 %v605, %v601
  %v760 = vpack.c.bf16 %v607, %v603
  %v761 = vpack.c.bf16 %v615, %v611
  %v762 = vpack.c.bf16 %v617, %v613
  %v763 = vpack.c.bf16 %v625, %v621
  %v764 = vpack.c.bf16 %v627, %v623
  %v765 = vpack.c.bf16 %v635, %v631
  %v766 = vpack.c.bf16 %v637, %v633
  %v767 = vpack.c.bf16 %v645, %v641
  %v768 = vpack.c.bf16 %v647, %v643
  %v769 = vpack.c.bf16 %v655, %v651
  %v770 = vpack.c.bf16 %v657, %v653
  %v771 = vpack.c.bf16 %v665, %v661
  %v772 = vpack.c.bf16 %v667, %v663
  %v773 = vpack.c.bf16 %v675, %v671
  %v774 = vpack.c.bf16 %v677, %v673
  %v775 = vpack.c.bf16 %v685, %v681
  %v776 = vpack.c.bf16 %v687, %v683
  %v777 = vpack.c.bf16 %v695, %v691
  %v778 = vpack.c.bf16 %v697, %v693
  %v779 = vpack.c.bf16 %v705, %v701
  %v780 = vpack.c.bf16 %v707, %v703
  %v781 = vpack.c.bf16 %v715, %v711
  %v782 = vpack.c.bf16 %v717, %v713
  %v783 = vmax.bf16 %v719, 0
  %v784 = vmax.bf16 %v720, 0
  %v785 = vmax.bf16 %v721, 0
  %v786 = vmax.bf16 %v722, 0
  %v787 = vmax.bf16 %v723, 0
  %v788 = vmax.bf16 %v724, 0
  %v789 = vmax.bf16 %v725, 0
  %v790 = vmax.bf16 %v726, 0
  %v791 = vmax.bf16 %v727, 0
  %v792 = vmax.bf16 %v728, 0
  %v793 = vmax.bf16 %v729, 0
  %v794 = vmax.bf16 %v730, 0
  %v795 = vmax.bf16 %v731, 0
  %v796 = vmax.bf16 %v732, 0
  %v797 = vmax.bf16 %v733, 0
  %v798 = vmax.bf16 %v734, 0
  %v799 = vmax.bf16 %v735, 0
  %v800 = vmax.bf16 %v736, 0
  %v801 = vmax.bf16 %v737, 0
  %v802 = vmax.bf16 %v738, 0
  %v803 = vmax.bf16 %v739, 0
  %v804 = vmax.bf16 %v740, 0
  %v805 = vmax.bf16 %v741, 0
  %v806 = vmax.bf16 %v742, 0
  %v807 = vmax.bf16 %v743, 0
  %v808 = vmax.bf16 %v744, 0
  %v809 = vmax.bf16 %v745, 0
  %v810 = vmax.bf16 %v746, 0
  %v811 = vmax.bf16 %v747, 0
  %v812 = vmax.bf16 %v748, 0
  %v813 = vmax.bf16 %v749, 0
  %v814 = vmax.bf16 %v750, 0
  %v815 = vmax.bf16 %v751, 0
  %v816 = vmax.bf16 %v752, 0
  %v817 = vmax.bf16 %v753, 0
  %v818 = vmax.bf16 %v754, 0
  %v819 = vmax.bf16 %v755, 0
  %v820 = vmax.bf16 %v756, 0
  %v821 = vmax.bf16 %v757, 0
  %v822 = vmax.bf16 %v758, 0
  %v823 = vmax.bf16 %v759, 0
  %v824 = vmax.bf16 %v760, 0
  %v825 = vmax.bf16 %v761, 0
  %v826 = vmax.bf16 %v762, 0
  %v827 = vmax.bf16 %v763, 0
  %v828 = vmax.bf16 %v764, 0
  %v829 = vmax.bf16 %v765, 0
  %v830 = vmax.bf16 %v766, 0
  %v831 = vmax.bf16 %v767, 0
  %v832 = vmax.bf16 %v768, 0
  %v833 = vmax.bf16 %v769, 0
  %v834 = vmax.bf16 %v770, 0
  %v835 = vmax.bf16 %v771, 0
  %v836 = vmax.bf16 %v772, 0
  %v837 = vmax.bf16 %v773, 0
  %v838 = vmax.bf16 %v774, 0
  %v839 = vmax.bf16 %v775, 0
  %v840 = vmax.bf16 %v776, 0
  %v841 = vmax.bf16 %v777, 0
  %v842 = vmax.bf16 %v778, 0
  %v843 = vmax.bf16 %v779, 0
  %v844 = vmax.bf16 %v780, 0
  %v845 = vmax.bf16 %v781, 0
  %v846 = vmax.bf16 %v782, 0
  %v847 = vld [vmem:[%s2] sm:$0xff]
  %v848 = vld [vmem:[%s2 + $0x8] sm:$0xff]
  %v849 = vld [vmem:[%s2 + $0x10] sm:$0xff]
  %v850 = vld [vmem:[%s2 + $0x18] sm:$0xff]
  %v851 = vld [vmem:[%s2 + $0x20] sm:$0xff]
  %v852 = vld [vmem:[%s2 + $0x28] sm:$0xff]
  %v853 = vld [vmem:[%s2 + $0x30] sm:$0xff]
  %v854 = vld [vmem:[%s2 + $0x38] sm:$0xff]
  %v855 = vld [vmem:[%s2 + $0x40] sm:$0xff]
  %v856 = vld [vmem:[%s2 + $0x48] sm:$0xff]
  %v857 = vld [vmem:[%s2 + $0x50] sm:$0xff]
  %v858 = vld [vmem:[%s2 + $0x58] sm:$0xff]
  %v859 = vld [vmem:[%s2 + $0x60] sm:$0xff]
  %v860 = vld [vmem:[%s2 + $0x68] sm:$0xff]
  %v861 = vld [vmem:[%s2 + $0x70] sm:$0xff]
  %v862 = vld [vmem:[%s2 + $0x78] sm:$0xff]
  %v863 = vld [vmem:[%s2 + $0x80] sm:$0xff]
  %v864 = vld [vmem:[%s2 + $0x88] sm:$0xff]
  %v865 = vld [vmem:[%s2 + $0x90] sm:$0xff]
  %v866 = vld [vmem:[%s2 + $0x98] sm:$0xff]
  %v867 = vld [vmem:[%s2 + $0xa0] sm:$0xff]
  %v868 = vld [vmem:[%s2 + $0xa8] sm:$0xff]
  %v869 = vld [vmem:[%s2 + $0xb0] sm:$0xff]
  %v870 = vld [vmem:[%s2 + $0xb8] sm:$0xff]
  %v871 = vld [vmem:[%s2 + $0xc0] sm:$0xff]
  %v872 = vld [vmem:[%s2 + $0xc8] sm:$0xff]
  %v873 = vld [vmem:[%s2 + $0xd0] sm:$0xff]
  %v874 = vld [vmem:[%s2 + $0xd8] sm:$0xff]
  %v875 = vld [vmem:[%s2 + $0xe0] sm:$0xff]
  %v876 = vld [vmem:[%s2 + $0xe8] sm:$0xff]
  %v877 = vld [vmem:[%s2 + $0xf0] sm:$0xff]
  %v878 = vld [vmem:[%s2 + $0xf8] sm:$0xff]
  %v879 = vld [vmem:[%s2 + $0x100] sm:$0xff]
  %v880 = vld [vmem:[%s2 + $0x108] sm:$0xff]
  %v881 = vld [vmem:[%s2 + $0x110] sm:$0xff]
  %v882 = vld [vmem:[%s2 + $0x118] sm:$0xff]
  %v883 = vld [vmem:[%s2 + $0x120] sm:$0xff]
  %v884 = vld [vmem:[%s2 + $0x128] sm:$0xff]
  %v885 = vld [vmem:[%s2 + $0x130] sm:$0xff]
  %v886 = vld [vmem:[%s2 + $0x138] sm:$0xff]
  %v887 = vld [vmem:[%s2 + $0x140] sm:$0xff]
  %v888 = vld [vmem:[%s2 + $0x148] sm:$0xff]
  %v889 = vld [vmem:[%s2 + $0x150] sm:$0xff]
  %v890 = vld [vmem:[%s2 + $0x158] sm:$0xff]
  %v891 = vld [vmem:[%s2 + $0x160] sm:$0xff]
  %v892 = vld [vmem:[%s2 + $0x168] sm:$0xff]
  %v893 = vld [vmem:[%s2 + $0x170] sm:$0xff]
  %v894 = vld [vmem:[%s2 + $0x178] sm:$0xff]
  %v895 = vld [vmem:[%s2 + $0x180] sm:$0xff]
  %v896 = vld [vmem:[%s2 + $0x188] sm:$0xff]
  %v897 = vld [vmem:[%s2 + $0x190] sm:$0xff]
  %v898 = vld [vmem:[%s2 + $0x198] sm:$0xff]
  %v899 = vld [vmem:[%s2 + $0x1a0] sm:$0xff]
  %v900 = vld [vmem:[%s2 + $0x1a8] sm:$0xff]
  %v901 = vld [vmem:[%s2 + $0x1b0] sm:$0xff]
  %v902 = vld [vmem:[%s2 + $0x1b8] sm:$0xff]
  %v903 = vld [vmem:[%s2 + $0x1c0] sm:$0xff]
  %v904 = vld [vmem:[%s2 + $0x1c8] sm:$0xff]
  %v905 = vld [vmem:[%s2 + $0x1d0] sm:$0xff]
  %v906 = vld [vmem:[%s2 + $0x1d8] sm:$0xff]
  %v907 = vld [vmem:[%s2 + $0x1e0] sm:$0xff]
  %v908 = vld [vmem:[%s2 + $0x1e8] sm:$0xff]
  %v909 = vld [vmem:[%s2 + $0x1f0] sm:$0xff]
  %v910 = vld [vmem:[%s2 + $0x1f8] sm:$0xff]
  %v975 = vunpack.c.l.b16 %v847
  %v976 = vunpack.c.h.b16 %v847
  %v977 = vunpack.c.l.b16 %v848
  %v978 = vunpack.c.h.b16 %v848
  %v979 = vunpack.c.l.b16 %v849
  %v980 = vunpack.c.h.b16 %v849
  %v981 = vunpack.c.l.b16 %v850
  %v982 = vunpack.c.h.b16 %v850
  %v983 = vunpack.c.l.b16 %v851
  %v984 = vunpack.c.h.b16 %v851
  %v985 = vunpack.c.l.b16 %v852
  %v986 = vunpack.c.h.b16 %v852
  %v987 = vunpack.c.l.b16 %v853
  %v988 = vunpack.c.h.b16 %v853
  %v989 = vunpack.c.l.b16 %v854
  %v990 = vunpack.c.h.b16 %v854
  %v991 = vunpack.c.l.b16 %v855
  %v992 = vunpack.c.h.b16 %v855
  %v993 = vunpack.c.l.b16 %v856
  %v994 = vunpack.c.h.b16 %v856
  %v995 = vunpack.c.l.b16 %v857
  %v996 = vunpack.c.h.b16 %v857
  %v997 = vunpack.c.l.b16 %v858
  %v998 = vunpack.c.h.b16 %v858
  %v999 = vunpack.c.l.b16 %v859
  %v1000 = vunpack.c.h.b16 %v859
  %v1001 = vunpack.c.l.b16 %v860
  %v1002 = vunpack.c.h.b16 %v860
  %v1003 = vunpack.c.l.b16 %v861
  %v1004 = vunpack.c.h.b16 %v861
  %v1005 = vunpack.c.l.b16 %v862
  %v1006 = vunpack.c.h.b16 %v862
  %v1007 = vunpack.c.l.b16 %v863
  %v1008 = vunpack.c.h.b16 %v863
  %v1009 = vunpack.c.l.b16 %v864
  %v1010 = vunpack.c.h.b16 %v864
  %v1011 = vunpack.c.l.b16 %v865
  %v1012 = vunpack.c.h.b16 %v865
  %v1013 = vunpack.c.l.b16 %v866
  %v1014 = vunpack.c.h.b16 %v866
  %v1015 = vunpack.c.l.b16 %v867
  %v1016 = vunpack.c.h.b16 %v867
  %v1017 = vunpack.c.l.b16 %v868
  %v1018 = vunpack.c.h.b16 %v868
  %v1019 = vunpack.c.l.b16 %v869
  %v1020 = vunpack.c.h.b16 %v869
  %v1021 = vunpack.c.l.b16 %v870
  %v1022 = vunpack.c.h.b16 %v870
  %v1023 = vunpack.c.l.b16 %v871
  %v1024 = vunpack.c.h.b16 %v871
  %v1025 = vunpack.c.l.b16 %v872
  %v1026 = vunpack.c.h.b16 %v872
  %v1027 = vunpack.c.l.b16 %v873
  %v1028 = vunpack.c.h.b16 %v873
  %v1029 = vunpack.c.l.b16 %v874
  %v1030 = vunpack.c.h.b16 %v874
  %v1031 = vunpack.c.l.b16 %v875
  %v1032 = vunpack.c.h.b16 %v875
  %v1033 = vunpack.c.l.b16 %v876
  %v1034 = vunpack.c.h.b16 %v876
  %v1035 = vunpack.c.l.b16 %v877
  %v1036 = vunpack.c.h.b16 %v877
  %v1037 = vunpack.c.l.b16 %v878
  %v1038 = vunpack.c.h.b16 %v878
  %v1039 = vunpack.c.l.b16 %v879
  %v1040 = vunpack.c.h.b16 %v879
  %v1041 = vunpack.c.l.b16 %v880
  %v1042 = vunpack.c.h.b16 %v880
  %v1043 = vunpack.c.l.b16 %v881
  %v1044 = vunpack.c.h.b16 %v881
  %v1045 = vunpack.c.l.b16 %v882
  %v1046 = vunpack.c.h.b16 %v882
  %v1047 = vunpack.c.l.b16 %v883
  %v1048 = vunpack.c.h.b16 %v883
  %v1049 = vunpack.c.l.b16 %v884
  %v1050 = vunpack.c.h.b16 %v884
  %v1051 = vunpack.c.l.b16 %v885
  %v1052 = vunpack.c.h.b16 %v885
  %v1053 = vunpack.c.l.b16 %v886
  %v1054 = vunpack.c.h.b16 %v886
  %v1055 = vunpack.c.l.b16 %v887
  %v1056 = vunpack.c.h.b16 %v887
  %v1057 = vunpack.c.l.b16 %v888
  %v1058 = vunpack.c.h.b16 %v888
  %v1059 = vunpack.c.l.b16 %v889
  %v1060 = vunpack.c.h.b16 %v889
  %v1061 = vunpack.c.l.b16 %v890
  %v1062 = vunpack.c.h.b16 %v890
  %v1063 = vunpack.c.l.b16 %v891
  %v1064 = vunpack.c.h.b16 %v891
  %v1065 = vunpack.c.l.b16 %v892
  %v1066 = vunpack.c.h.b16 %v892
  %v1067 = vunpack.c.l.b16 %v893
  %v1068 = vunpack.c.h.b16 %v893
  %v1069 = vunpack.c.l.b16 %v894
  %v1070 = vunpack.c.h.b16 %v894
  %v1071 = vunpack.c.l.b16 %v895
  %v1072 = vunpack.c.h.b16 %v895
  %v1073 = vunpack.c.l.b16 %v896
  %v1074 = vunpack.c.h.b16 %v896
  %v1075 = vunpack.c.l.b16 %v897
  %v1076 = vunpack.c.h.b16 %v897
  %v1077 = vunpack.c.l.b16 %v898
  %v1078 = vunpack.c.h.b16 %v898
  %v1079 = vunpack.c.l.b16 %v899
  %v1080 = vunpack.c.h.b16 %v899
  %v1081 = vunpack.c.l.b16 %v900
  %v1082 = vunpack.c.h.b16 %v900
  %v1083 = vunpack.c.l.b16 %v901
  %v1084 = vunpack.c.h.b16 %v901
  %v1085 = vunpack.c.l.b16 %v902
  %v1086 = vunpack.c.h.b16 %v902
  %v1087 = vunpack.c.l.b16 %v903
  %v1088 = vunpack.c.h.b16 %v903
  %v1089 = vunpack.c.l.b16 %v904
  %v1090 = vunpack.c.h.b16 %v904
  %v1091 = vunpack.c.l.b16 %v905
  %v1092 = vunpack.c.h.b16 %v905
  %v1093 = vunpack.c.l.b16 %v906
  %v1094 = vunpack.c.h.b16 %v906
  %v1095 = vunpack.c.l.b16 %v907
  %v1096 = vunpack.c.h.b16 %v907
  %v1097 = vunpack.c.l.b16 %v908
  %v1098 = vunpack.c.h.b16 %v908
  %v1099 = vunpack.c.l.b16 %v909
  %v1100 = vunpack.c.h.b16 %v909
  %v1101 = vunpack.c.l.b16 %v910
  %v1102 = vunpack.c.h.b16 %v910
  %v1103 = vpack.c.b16 %v979, %v975
  %v1104 = vpack.c.b16 %v980, %v976
  %v1105 = vpack.c.b16 %v981, %v977
  %v1106 = vpack.c.b16 %v982, %v978
  %v1107 = vpack.c.b16 %v987, %v983
  %v1108 = vpack.c.b16 %v988, %v984
  %v1109 = vpack.c.b16 %v989, %v985
  %v1110 = vpack.c.b16 %v990, %v986
  %v1111 = vpack.c.b16 %v995, %v991
  %v1112 = vpack.c.b16 %v996, %v992
  %v1113 = vpack.c.b16 %v997, %v993
  %v1114 = vpack.c.b16 %v998, %v994
  %v1115 = vpack.c.b16 %v1003, %v999
  %v1116 = vpack.c.b16 %v1004, %v1000
  %v1117 = vpack.c.b16 %v1005, %v1001
  %v1118 = vpack.c.b16 %v1006, %v1002
  %v1119 = vpack.c.b16 %v1011, %v1007
  %v1120 = vpack.c.b16 %v1012, %v1008
  %v1121 = vpack.c.b16 %v1013, %v1009
  %v1122 = vpack.c.b16 %v1014, %v1010
  %v1123 = vpack.c.b16 %v1019, %v1015
  %v1124 = vpack.c.b16 %v1020, %v1016
  %v1125 = vpack.c.b16 %v1021, %v1017
  %v1126 = vpack.c.b16 %v1022, %v1018
  %v1127 = vpack.c.b16 %v1027, %v1023
  %v1128 = vpack.c.b16 %v1028, %v1024
  %v1129 = vpack.c.b16 %v1029, %v1025
  %v1130 = vpack.c.b16 %v1030, %v1026
  %v1131 = vpack.c.b16 %v1035, %v1031
  %v1132 = vpack.c.b16 %v1036, %v1032
  %v1133 = vpack.c.b16 %v1037, %v1033
  %v1134 = vpack.c.b16 %v1038, %v1034
  %v1135 = vpack.c.b16 %v1043, %v1039
  %v1136 = vpack.c.b16 %v1044, %v1040
  %v1137 = vpack.c.b16 %v1045, %v1041
  %v1138 = vpack.c.b16 %v1046, %v1042
  %v1139 = vpack.c.b16 %v1051, %v1047
  %v1140 = vpack.c.b16 %v1052, %v1048
  %v1141 = vpack.c.b16 %v1053, %v1049
  %v1142 = vpack.c.b16 %v1054, %v1050
  %v1143 = vpack.c.b16 %v1059, %v1055
  %v1144 = vpack.c.b16 %v1060, %v1056
  %v1145 = vpack.c.b16 %v1061, %v1057
  %v1146 = vpack.c.b16 %v1062, %v1058
  %v1147 = vpack.c.b16 %v1067, %v1063
  %v1148 = vpack.c.b16 %v1068, %v1064
  %v1149 = vpack.c.b16 %v1069, %v1065
  %v1150 = vpack.c.b16 %v1070, %v1066
  %v1151 = vpack.c.b16 %v1075, %v1071
  %v1152 = vpack.c.b16 %v1076, %v1072
  %v1153 = vpack.c.b16 %v1077, %v1073
  %v1154 = vpack.c.b16 %v1078, %v1074
  %v1155 = vpack.c.b16 %v1083, %v1079
  %v1156 = vpack.c.b16 %v1084, %v1080
  %v1157 = vpack.c.b16 %v1085, %v1081
  %v1158 = vpack.c.b16 %v1086, %v1082
  %v1159 = vpack.c.b16 %v1091, %v1087
  %v1160 = vpack.c.b16 %v1092, %v1088
  %v1161 = vpack.c.b16 %v1093, %v1089
  %v1162 = vpack.c.b16 %v1094, %v1090
  %v1163 = vpack.c.b16 %v1099, %v1095
  %v1164 = vpack.c.b16 %v1100, %v1096
  %v1165 = vpack.c.b16 %v1101, %v1097
  %v1166 = vpack.c.b16 %v1102, %v1098
  %1231 = vmatprep.subr.bf16.mxu0 %v784
  %1232 = vmatpush1.bf16.msra.mxu0 %v783
  %1233 = vmatprep.subr.bf16.mxu0 %v786
  %1234 = vmatpush1.bf16.msra.mxu0 %v785
  %1235 = vmatprep.subr.bf16.mxu0 %v788
  %1236 = vmatpush1.bf16.msra.mxu0 %v787
  %1237 = vmatprep.subr.bf16.mxu0 %v790
  %1238 = vmatpush1.bf16.msra.mxu0 %v789
  %1239 = vmatprep.subr.bf16.mxu0 %v792
  %1240 = vmatpush1.bf16.msra.mxu0 %v791
  %1241 = vmatprep.subr.bf16.mxu0 %v794
  %1242 = vmatpush1.bf16.msra.mxu0 %v793
  %1243 = vmatprep.subr.bf16.mxu0 %v796
  %1244 = vmatpush1.bf16.msra.mxu0 %v795
  %1245 = vmatprep.subr.bf16.mxu0 %v798
  %1246 = vmatpush1.bf16.msra.mxu0 %v797
  %1247 = vmatprep.subr.bf16.mxu0 %v800
  %1248 = vmatpush1.bf16.msra.mxu0 %v799
  %1249 = vmatprep.subr.bf16.mxu0 %v802
  %1250 = vmatpush1.bf16.msra.mxu0 %v801
  %1251 = vmatprep.subr.bf16.mxu0 %v804
  %1252 = vmatpush1.bf16.msra.mxu0 %v803
  %1253 = vmatprep.subr.bf16.mxu0 %v806
  %1254 = vmatpush1.bf16.msra.mxu0 %v805
  %1255 = vmatprep.subr.bf16.mxu0 %v808
  %1256 = vmatpush1.bf16.msra.mxu0 %v807
  %1257 = vmatprep.subr.bf16.mxu0 %v810
  %1258 = vmatpush1.bf16.msra.mxu0 %v809
  %1259 = vmatprep.subr.bf16.mxu0 %v812
  %1260 = vmatpush1.bf16.msra.mxu0 %v811
  %1261 = vmatprep.subr.bf16.mxu0 %v814
  %1262 = vmatpush1.bf16.msra.mxu0 %v813
  %1263 = vmatprep.mubr.bf16.mxu0 %v1104
  %1264 = vmatmul.mubr.bf16.gmra.mrb[0].mxu0 %v1103
  %v1265 = vpop.f32.mrb[0].mxu0
  %v1266 = vadd.f32 0.0, %v1265
  %v1267 = vpop.f32.mrb[0].mxu0
  %v1268 = vadd.f32 0.0, %v1267
  %v1269 = vpop.f32.mrb[0].mxu0
  %v1270 = vadd.f32 0.0, %v1269
  %v1271 = vpop.f32.mrb[0].mxu0
  %v1272 = vadd.f32 0.0, %v1271
  %1273 = vmatprep.mubr.bf16.mxu0 %v1108
  %1274 = vmatmul.mubr.bf16.gmra.mrb[0].mxu0 %v1107
  %v1275 = vpop.f32.mrb[0].mxu0
  %v1276 = vadd.f32 0.0, %v1275
  %v1277 = vpop.f32.mrb[0].mxu0
  %v1278 = vadd.f32 0.0, %v1277
  %v1279 = vpop.f32.mrb[0].mxu0
  %v1280 = vadd.f32 0.0, %v1279
  %v1281 = vpop.f32.mrb[0].mxu0
  %v1282 = vadd.f32 0.0, %v1281
  %1283 = vmatprep.mubr.bf16.mxu0 %v1112
  %1284 = vmatmul.mubr.bf16.gmra.mrb[0].mxu0 %v1111
  %v1285 = vpop.f32.mrb[0].mxu0
  %v1286 = vadd.f32 0.0, %v1285
  %v1287 = vpop.f32.mrb[0].mxu0
  %v1288 = vadd.f32 0.0, %v1287
  %v1289 = vpop.f32.mrb[0].mxu0
  %v1290 = vadd.f32 0.0, %v1289
  %v1291 = vpop.f32.mrb[0].mxu0
  %v1292 = vadd.f32 0.0, %v1291
  %1293 = vmatprep.mubr.bf16.mxu0 %v1116
  %1294 = vmatmul.mubr.bf16.gmra.mrb[0].mxu0 %v1115
  %v1295 = vpop.f32.mrb[0].mxu0
  %v1296 = vadd.f32 0.0, %v1295
  %v1297 = vpop.f32.mrb[0].mxu0
  %v1298 = vadd.f32 0.0, %v1297
  %v1299 = vpop.f32.mrb[0].mxu0
  %v1300 = vadd.f32 0.0, %v1299
  %v1301 = vpop.f32.mrb[0].mxu0
  %v1302 = vadd.f32 0.0, %v1301
  %1303 = vmatprep.mubr.bf16.mxu0 %v1120
  %1304 = vmatmul.mubr.bf16.gmra.mrb[0].mxu0 %v1119
  %v1305 = vpop.f32.mrb[0].mxu0
  %v1306 = vadd.f32 0.0, %v1305
  %v1307 = vpop.f32.mrb[0].mxu0
  %v1308 = vadd.f32 0.0, %v1307
  %v1309 = vpop.f32.mrb[0].mxu0
  %v1310 = vadd.f32 0.0, %v1309
  %v1311 = vpop.f32.mrb[0].mxu0
  %v1312 = vadd.f32 0.0, %v1311
  %1313 = vmatprep.mubr.bf16.mxu0 %v1124
  %1314 = vmatmul.mubr.bf16.gmra.mrb[0].mxu0 %v1123
  %v1315 = vpop.f32.mrb[0].mxu0
  %v1316 = vadd.f32 0.0, %v1315
  %v1317 = vpop.f32.mrb[0].mxu0
  %v1318 = vadd.f32 0.0, %v1317
  %v1319 = vpop.f32.mrb[0].mxu0
  %v1320 = vadd.f32 0.0, %v1319
  %v1321 = vpop.f32.mrb[0].mxu0
  %v1322 = vadd.f32 0.0, %v1321
  %1323 = vmatprep.mubr.bf16.mxu0 %v1128
  %1324 = vmatmul.mubr.bf16.gmra.mrb[0].mxu0 %v1127
  %v1325 = vpop.f32.mrb[0].mxu0
  %v1326 = vadd.f32 0.0, %v1325
  %v1327 = vpop.f32.mrb[0].mxu0
  %v1328 = vadd.f32 0.0, %v1327
  %v1329 = vpop.f32.mrb[0].mxu0
  %v1330 = vadd.f32 0.0, %v1329
  %v1331 = vpop.f32.mrb[0].mxu0
  %v1332 = vadd.f32 0.0, %v1331
  %1333 = vmatprep.mubr.bf16.mxu0 %v1132
  %1334 = vmatmul.mubr.bf16.gmra.mrb[0].mxu0 %v1131
  %v1335 = vpop.f32.mrb[0].mxu0
  %v1336 = vadd.f32 0.0, %v1335
  %v1337 = vpop.f32.mrb[0].mxu0
  %v1338 = vadd.f32 0.0, %v1337
  %v1339 = vpop.f32.mrb[0].mxu0
  %v1340 = vadd.f32 0.0, %v1339
  %v1341 = vpop.f32.mrb[0].mxu0
  %v1342 = vadd.f32 0.0, %v1341
  %1343 = vmatprep.mubr.bf16.mxu0 %v1136
  %1344 = vmatmul.mubr.bf16.gmra.mrb[0].mxu0 %v1135
  %v1345 = vpop.f32.mrb[0].mxu0
  %v1346 = vadd.f32 0.0, %v1345
  %v1347 = vpop.f32.mrb[0].mxu0
  %v1348 = vadd.f32 0.0, %v1347
  %v1349 = vpop.f32.mrb[0].mxu0
  %v1350 = vadd.f32 0.0, %v1349
  %v1351 = vpop.f32.mrb[0].mxu0
  %v1352 = vadd.f32 0.0, %v1351
  %1353 = vmatprep.mubr.bf16.mxu0 %v1140
  %1354 = vmatmul.mubr.bf16.gmra.mrb[0].mxu0 %v1139
  %v1355 = vpop.f32.mrb[0].mxu0
  %v1356 = vadd.f32 0.0, %v1355
  %v1357 = vpop.f32.mrb[0].mxu0
  %v1358 = vadd.f32 0.0, %v1357
  %v1359 = vpop.f32.mrb[0].mxu0
  %v1360 = vadd.f32 0.0, %v1359
  %v1361 = vpop.f32.mrb[0].mxu0
  %v1362 = vadd.f32 0.0, %v1361
  %1363 = vmatprep.mubr.bf16.mxu0 %v1144
  %1364 = vmatmul.mubr.bf16.gmra.mrb[0].mxu0 %v1143
  %v1365 = vpop.f32.mrb[0].mxu0
  %v1366 = vadd.f32 0.0, %v1365
  %v1367 = vpop.f32.mrb[0].mxu0
  %v1368 = vadd.f32 0.0, %v1367
  %v1369 = vpop.f32.mrb[0].mxu0
  %v1370 = vadd.f32 0.0, %v1369
  %v1371 = vpop.f32.mrb[0].mxu0
  %v1372 = vadd.f32 0.0, %v1371
  %1373 = vmatprep.mubr.bf16.mxu0 %v1148
  %1374 = vmatmul.mubr.bf16.gmra.mrb[0].mxu0 %v1147
  %v1375 = vpop.f32.mrb[0].mxu0
  %v1376 = vadd.f32 0.0, %v1375
  %v1377 = vpop.f32.mrb[0].mxu0
  %v1378 = vadd.f32 0.0, %v1377
  %v1379 = vpop.f32.mrb[0].mxu0
  %v1380 = vadd.f32 0.0, %v1379
  %v1381 = vpop.f32.mrb[0].mxu0
  %v1382 = vadd.f32 0.0, %v1381
  %1383 = vmatprep.mubr.bf16.mxu0 %v1152
  %1384 = vmatmul.mubr.bf16.gmra.mrb[0].mxu0 %v1151
  %v1385 = vpop.f32.mrb[0].mxu0
  %v1386 = vadd.f32 0.0, %v1385
  %v1387 = vpop.f32.mrb[0].mxu0
  %v1388 = vadd.f32 0.0, %v1387
  %v1389 = vpop.f32.mrb[0].mxu0
  %v1390 = vadd.f32 0.0, %v1389
  %v1391 = vpop.f32.mrb[0].mxu0
  %v1392 = vadd.f32 0.0, %v1391
  %1393 = vmatprep.mubr.bf16.mxu0 %v1156
  %1394 = vmatmul.mubr.bf16.gmra.mrb[0].mxu0 %v1155
  %v1395 = vpop.f32.mrb[0].mxu0
  %v1396 = vadd.f32 0.0, %v1395
  %v1397 = vpop.f32.mrb[0].mxu0
  %v1398 = vadd.f32 0.0, %v1397
  %v1399 = vpop.f32.mrb[0].mxu0
  %v1400 = vadd.f32 0.0, %v1399
  %v1401 = vpop.f32.mrb[0].mxu0
  %v1402 = vadd.f32 0.0, %v1401
  %1403 = vmatprep.mubr.bf16.mxu0 %v1160
  %1404 = vmatmul.mubr.bf16.gmra.mrb[0].mxu0 %v1159
  %v1405 = vpop.f32.mrb[0].mxu0
  %v1406 = vadd.f32 0.0, %v1405
  %v1407 = vpop.f32.mrb[0].mxu0
  %v1408 = vadd.f32 0.0, %v1407
  %v1409 = vpop.f32.mrb[0].mxu0
  %v1410 = vadd.f32 0.0, %v1409
  %v1411 = vpop.f32.mrb[0].mxu0
  %v1412 = vadd.f32 0.0, %v1411
  %1413 = vmatprep.mubr.bf16.mxu0 %v1164
  %1414 = vmatmul.mubr.bf16.gmra.mrb[0].mxu0 %v1163
  %v1415 = vpop.f32.mrb[0].mxu0
  %v1416 = vadd.f32 0.0, %v1415
  %v1417 = vpop.f32.mrb[0].mxu0
  %v1418 = vadd.f32 0.0, %v1417
  %v1419 = vpop.f32.mrb[0].mxu0
  %v1420 = vadd.f32 0.0, %v1419
  %v1421 = vpop.f32.mrb[0].mxu0
  %v1422 = vadd.f32 0.0, %v1421
  %1423 = vdwg.mxu0
  %1424 = vmatprep.subr.bf16.mxu0 %v816
  %1425 = vmatpush1.bf16.msra.mxu0 %v815
  %1426 = vmatprep.subr.bf16.mxu0 %v818
  %1427 = vmatpush1.bf16.msra.mxu0 %v817
  %1428 = vmatprep.subr.bf16.mxu0 %v820
  %1429 = vmatpush1.bf16.msra.mxu0 %v819
  %1430 = vmatprep.subr.bf16.mxu0 %v822
  %1431 = vmatpush1.bf16.msra.mxu0 %v821
  %1432 = vmatprep.subr.bf16.mxu0 %v824
  %1433 = vmatpush1.bf16.msra.mxu0 %v823
  %1434 = vmatprep.subr.bf16.mxu0 %v826
  %1435 = vmatpush1.bf16.msra.mxu0 %v825
  %1436 = vmatprep.subr.bf16.mxu0 %v828
  %1437 = vmatpush1.bf16.msra.mxu0 %v827
  %1438 = vmatprep.subr.bf16.mxu0 %v830
  %1439 = vmatpush1.bf16.msra.mxu0 %v829
  %1440 = vmatprep.subr.bf16.mxu0 %v832
  %1441 = vmatpush1.bf16.msra.mxu0 %v831
  %1442 = vmatprep.subr.bf16.mxu0 %v834
  %1443 = vmatpush1.bf16.msra.mxu0 %v833
  %1444 = vmatprep.subr.bf16.mxu0 %v836
  %1445 = vmatpush1.bf16.msra.mxu0 %v835
  %1446 = vmatprep.subr.bf16.mxu0 %v838
  %1447 = vmatpush1.bf16.msra.mxu0 %v837
  %1448 = vmatprep.subr.bf16.mxu0 %v840
  %1449 = vmatpush1.bf16.msra.mxu0 %v839
  %1450 = vmatprep.subr.bf16.mxu0 %v842
  %1451 = vmatpush1.bf16.msra.mxu0 %v841
  %1452 = vmatprep.subr.bf16.mxu0 %v844
  %1453 = vmatpush1.bf16.msra.mxu0 %v843
  %1454 = vmatprep.subr.bf16.mxu0 %v846
  %1455 = vmatpush1.bf16.msra.mxu0 %v845
  %1456 = vmatprep.mubr.bf16.mxu0 %v1106
  %1457 = vmatmul.mubr.bf16.gmra.mrb[0].mxu0 %v1105
  %v1458 = vpop.f32.mrb[0].mxu0
  %v1459 = vadd.f32 %v1266, %v1458
  %v1460 = vpop.f32.mrb[0].mxu0
  %v1461 = vadd.f32 %v1268, %v1460
  %v1462 = vpop.f32.mrb[0].mxu0
  %v1463 = vadd.f32 %v1270, %v1462
  %v1464 = vpop.f32.mrb[0].mxu0
  %v1465 = vadd.f32 %v1272, %v1464
  %1466 = vmatprep.mubr.bf16.mxu0 %v1110
  %1467 = vmatmul.mubr.bf16.gmra.mrb[0].mxu0 %v1109
  %v1468 = vpop.f32.mrb[0].mxu0
  %v1469 = vadd.f32 %v1276, %v1468
  %v1470 = vpop.f32.mrb[0].mxu0
  %v1471 = vadd.f32 %v1278, %v1470
  %v1472 = vpop.f32.mrb[0].mxu0
  %v1473 = vadd.f32 %v1280, %v1472
  %v1474 = vpop.f32.mrb[0].mxu0
  %v1475 = vadd.f32 %v1282, %v1474
  %1476 = vmatprep.mubr.bf16.mxu0 %v1114
  %1477 = vmatmul.mubr.bf16.gmra.mrb[0].mxu0 %v1113
  %v1478 = vpop.f32.mrb[0].mxu0
  %v1479 = vadd.f32 %v1286, %v1478
  %v1480 = vpop.f32.mrb[0].mxu0
  %v1481 = vadd.f32 %v1288, %v1480
  %v1482 = vpop.f32.mrb[0].mxu0
  %v1483 = vadd.f32 %v1290, %v1482
  %v1484 = vpop.f32.mrb[0].mxu0
  %v1485 = vadd.f32 %v1292, %v1484
  %1486 = vmatprep.mubr.bf16.mxu0 %v1118
  %1487 = vmatmul.mubr.bf16.gmra.mrb[0].mxu0 %v1117
  %v1488 = vpop.f32.mrb[0].mxu0
  %v1489 = vadd.f32 %v1296, %v1488
  %v1490 = vpop.f32.mrb[0].mxu0
  %v1491 = vadd.f32 %v1298, %v1490
  %v1492 = vpop.f32.mrb[0].mxu0
  %v1493 = vadd.f32 %v1300, %v1492
  %v1494 = vpop.f32.mrb[0].mxu0
  %v1495 = vadd.f32 %v1302, %v1494
  %1496 = vmatprep.mubr.bf16.mxu0 %v1122
  %1497 = vmatmul.mubr.bf16.gmra.mrb[0].mxu0 %v1121
  %v1498 = vpop.f32.mrb[0].mxu0
  %v1499 = vadd.f32 %v1306, %v1498
  %v1500 = vpop.f32.mrb[0].mxu0
  %v1501 = vadd.f32 %v1308, %v1500
  %v1502 = vpop.f32.mrb[0].mxu0
  %v1503 = vadd.f32 %v1310, %v1502
  %v1504 = vpop.f32.mrb[0].mxu0
  %v1505 = vadd.f32 %v1312, %v1504
  %1506 = vmatprep.mubr.bf16.mxu0 %v1126
  %1507 = vmatmul.mubr.bf16.gmra.mrb[0].mxu0 %v1125
  %v1508 = vpop.f32.mrb[0].mxu0
  %v1509 = vadd.f32 %v1316, %v1508
  %v1510 = vpop.f32.mrb[0].mxu0
  %v1511 = vadd.f32 %v1318, %v1510
  %v1512 = vpop.f32.mrb[0].mxu0
  %v1513 = vadd.f32 %v1320, %v1512
  %v1514 = vpop.f32.mrb[0].mxu0
  %v1515 = vadd.f32 %v1322, %v1514
  %1516 = vmatprep.mubr.bf16.mxu0 %v1130
  %1517 = vmatmul.mubr.bf16.gmra.mrb[0].mxu0 %v1129
  %v1518 = vpop.f32.mrb[0].mxu0
  %v1519 = vadd.f32 %v1326, %v1518
  %v1520 = vpop.f32.mrb[0].mxu0
  %v1521 = vadd.f32 %v1328, %v1520
  %v1522 = vpop.f32.mrb[0].mxu0
  %v1523 = vadd.f32 %v1330, %v1522
  %v1524 = vpop.f32.mrb[0].mxu0
  %v1525 = vadd.f32 %v1332, %v1524
  %1526 = vmatprep.mubr.bf16.mxu0 %v1134
  %1527 = vmatmul.mubr.bf16.gmra.mrb[0].mxu0 %v1133
  %v1528 = vpop.f32.mrb[0].mxu0
  %v1529 = vadd.f32 %v1336, %v1528
  %v1530 = vpop.f32.mrb[0].mxu0
  %v1531 = vadd.f32 %v1338, %v1530
  %v1532 = vpop.f32.mrb[0].mxu0
  %v1533 = vadd.f32 %v1340, %v1532
  %v1534 = vpop.f32.mrb[0].mxu0
  %v1535 = vadd.f32 %v1342, %v1534
  %1536 = vmatprep.mubr.bf16.mxu0 %v1138
  %1537 = vmatmul.mubr.bf16.gmra.mrb[0].mxu0 %v1137
  %v1538 = vpop.f32.mrb[0].mxu0
  %v1539 = vadd.f32 %v1346, %v1538
  %v1540 = vpop.f32.mrb[0].mxu0
  %v1541 = vadd.f32 %v1348, %v1540
  %v1542 = vpop.f32.mrb[0].mxu0
  %v1543 = vadd.f32 %v1350, %v1542
  %v1544 = vpop.f32.mrb[0].mxu0
  %v1545 = vadd.f32 %v1352, %v1544
  %1546 = vmatprep.mubr.bf16.mxu0 %v1142
  %1547 = vmatmul.mubr.bf16.gmra.mrb[0].mxu0 %v1141
  %v1548 = vpop.f32.mrb[0].mxu0
  %v1549 = vadd.f32 %v1356, %v1548
  %v1550 = vpop.f32.mrb[0].mxu0
  %v1551 = vadd.f32 %v1358, %v1550
  %v1552 = vpop.f32.mrb[0].mxu0
  %v1553 = vadd.f32 %v1360, %v1552
  %v1554 = vpop.f32.mrb[0].mxu0
  %v1555 = vadd.f32 %v1362, %v1554
  %1556 = vmatprep.mubr.bf16.mxu0 %v1146
  %1557 = vmatmul.mubr.bf16.gmra.mrb[0].mxu0 %v1145
  %v1558 = vpop.f32.mrb[0].mxu0
  %v1559 = vadd.f32 %v1366, %v1558
  %v1560 = vpop.f32.mrb[0].mxu0
  %v1561 = vadd.f32 %v1368, %v1560
  %v1562 = vpop.f32.mrb[0].mxu0
  %v1563 = vadd.f32 %v1370, %v1562
  %v1564 = vpop.f32.mrb[0].mxu0
  %v1565 = vadd.f32 %v1372, %v1564
  %1566 = vmatprep.mubr.bf16.mxu0 %v1150
  %1567 = vmatmul.mubr.bf16.gmra.mrb[0].mxu0 %v1149
  %v1568 = vpop.f32.mrb[0].mxu0
  %v1569 = vadd.f32 %v1376, %v1568
  %v1570 = vpop.f32.mrb[0].mxu0
  %v1571 = vadd.f32 %v1378, %v1570
  %v1572 = vpop.f32.mrb[0].mxu0
  %v1573 = vadd.f32 %v1380, %v1572
  %v1574 = vpop.f32.mrb[0].mxu0
  %v1575 = vadd.f32 %v1382, %v1574
  %1576 = vmatprep.mubr.bf16.mxu0 %v1154
  %1577 = vmatmul.mubr.bf16.gmra.mrb[0].mxu0 %v1153
  %v1578 = vpop.f32.mrb[0].mxu0
  %v1579 = vadd.f32 %v1386, %v1578
  %v1580 = vpop.f32.mrb[0].mxu0
  %v1581 = vadd.f32 %v1388, %v1580
  %v1582 = vpop.f32.mrb[0].mxu0
  %v1583 = vadd.f32 %v1390, %v1582
  %v1584 = vpop.f32.mrb[0].mxu0
  %v1585 = vadd.f32 %v1392, %v1584
  %1586 = vmatprep.mubr.bf16.mxu0 %v1158
  %1587 = vmatmul.mubr.bf16.gmra.mrb[0].mxu0 %v1157
  %v1588 = vpop.f32.mrb[0].mxu0
  %v1589 = vadd.f32 %v1396, %v1588
  %v1590 = vpop.f32.mrb[0].mxu0
  %v1591 = vadd.f32 %v1398, %v1590
  %v1592 = vpop.f32.mrb[0].mxu0
  %v1593 = vadd.f32 %v1400, %v1592
  %v1594 = vpop.f32.mrb[0].mxu0
  %v1595 = vadd.f32 %v1402, %v1594
  %1596 = vmatprep.mubr.bf16.mxu0 %v1162
  %1597 = vmatmul.mubr.bf16.gmra.mrb[0].mxu0 %v1161
  %v1598 = vpop.f32.mrb[0].mxu0
  %v1599 = vadd.f32 %v1406, %v1598
  %v1600 = vpop.f32.mrb[0].mxu0
  %v1601 = vadd.f32 %v1408, %v1600
  %v1602 = vpop.f32.mrb[0].mxu0
  %v1603 = vadd.f32 %v1410, %v1602
  %v1604 = vpop.f32.mrb[0].mxu0
  %v1605 = vadd.f32 %v1412, %v1604
  %1606 = vmatprep.mubr.bf16.mxu0 %v1166
  %1607 = vmatmul.mubr.bf16.gmra.mrb[0].mxu0 %v1165
  %v1608 = vpop.f32.mrb[0].mxu0
  %v1609 = vadd.f32 %v1416, %v1608
  %v1610 = vpop.f32.mrb[0].mxu0
  %v1611 = vadd.f32 %v1418, %v1610
  %v1612 = vpop.f32.mrb[0].mxu0
  %v1613 = vadd.f32 %v1420, %v1612
  %v1614 = vpop.f32.mrb[0].mxu0
  %v1615 = vadd.f32 %v1422, %v1614
  %1616 = vdwg.mxu0
  %v1617 = vpack.c.bf16 %v1463, %v1459
  %v1618 = vpack.c.bf16 %v1465, %v1461
  %v1619 = vpack.c.bf16 %v1473, %v1469
  %v1620 = vpack.c.bf16 %v1475, %v1471
  %v1621 = vpack.c.bf16 %v1483, %v1479
  %v1622 = vpack.c.bf16 %v1485, %v1481
  %v1623 = vpack.c.bf16 %v1493, %v1489
  %v1624 = vpack.c.bf16 %v1495, %v1491
  %v1625 = vpack.c.bf16 %v1503, %v1499
  %v1626 = vpack.c.bf16 %v1505, %v1501
  %v1627 = vpack.c.bf16 %v1513, %v1509
  %v1628 = vpack.c.bf16 %v1515, %v1511
  %v1629 = vpack.c.bf16 %v1523, %v1519
  %v1630 = vpack.c.bf16 %v1525, %v1521
  %v1631 = vpack.c.bf16 %v1533, %v1529
  %v1632 = vpack.c.bf16 %v1535, %v1531
  %v1633 = vpack.c.bf16 %v1543, %v1539
  %v1634 = vpack.c.bf16 %v1545, %v1541
  %v1635 = vpack.c.bf16 %v1553, %v1549
  %v1636 = vpack.c.bf16 %v1555, %v1551
  %v1637 = vpack.c.bf16 %v1563, %v1559
  %v1638 = vpack.c.bf16 %v1565, %v1561
  %v1639 = vpack.c.bf16 %v1573, %v1569
  %v1640 = vpack.c.bf16 %v1575, %v1571
  %v1641 = vpack.c.bf16 %v1583, %v1579
  %v1642 = vpack.c.bf16 %v1585, %v1581
  %v1643 = vpack.c.bf16 %v1593, %v1589
  %v1644 = vpack.c.bf16 %v1595, %v1591
  %v1645 = vpack.c.bf16 %v1603, %v1599
  %v1646 = vpack.c.bf16 %v1605, %v1601
  %v1647 = vpack.c.bf16 %v1613, %v1609
  %v1648 = vpack.c.bf16 %v1615, %v1611
  %v1649 = vld [vmem:[%s3] sm:$0xff]
  %v1650 = vld [vmem:[%s3 + $0x8] sm:$0xff]
  %v1651 = vld [vmem:[%s3 + $0x10] sm:$0xff]
  %v1652 = vld [vmem:[%s3 + $0x18] sm:$0xff]
  %v1653 = vld [vmem:[%s3 + $0x20] sm:$0xff]
  %v1654 = vld [vmem:[%s3 + $0x28] sm:$0xff]
  %v1655 = vld [vmem:[%s3 + $0x30] sm:$0xff]
  %v1656 = vld [vmem:[%s3 + $0x38] sm:$0xff]
  %v1657 = vld [vmem:[%s3 + $0x40] sm:$0xff]
  %v1658 = vld [vmem:[%s3 + $0x48] sm:$0xff]
  %v1659 = vld [vmem:[%s3 + $0x50] sm:$0xff]
  %v1660 = vld [vmem:[%s3 + $0x58] sm:$0xff]
  %v1661 = vld [vmem:[%s3 + $0x60] sm:$0xff]
  %v1662 = vld [vmem:[%s3 + $0x68] sm:$0xff]
  %v1663 = vld [vmem:[%s3 + $0x70] sm:$0xff]
  %v1664 = vld [vmem:[%s3 + $0x78] sm:$0xff]
  %v1665 = vld [vmem:[%s3 + $0x80] sm:$0xff]
  %v1666 = vld [vmem:[%s3 + $0x88] sm:$0xff]
  %v1667 = vld [vmem:[%s3 + $0x90] sm:$0xff]
  %v1668 = vld [vmem:[%s3 + $0x98] sm:$0xff]
  %v1669 = vld [vmem:[%s3 + $0xa0] sm:$0xff]
  %v1670 = vld [vmem:[%s3 + $0xa8] sm:$0xff]
  %v1671 = vld [vmem:[%s3 + $0xb0] sm:$0xff]
  %v1672 = vld [vmem:[%s3 + $0xb8] sm:$0xff]
  %v1673 = vld [vmem:[%s3 + $0xc0] sm:$0xff]
  %v1674 = vld [vmem:[%s3 + $0xc8] sm:$0xff]
  %v1675 = vld [vmem:[%s3 + $0xd0] sm:$0xff]
  %v1676 = vld [vmem:[%s3 + $0xd8] sm:$0xff]
  %v1677 = vld [vmem:[%s3 + $0xe0] sm:$0xff]
  %v1678 = vld [vmem:[%s3 + $0xe8] sm:$0xff]
  %v1679 = vld [vmem:[%s3 + $0xf0] sm:$0xff]
  %v1680 = vld [vmem:[%s3 + $0xf8] sm:$0xff]
  %v1681 = vpack.c.bf16 %v1650, %v1649
  %v1682 = vpack.c.bf16 %v1652, %v1651
  %v1683 = vpack.c.bf16 %v1654, %v1653
  %v1684 = vpack.c.bf16 %v1656, %v1655
  %v1685 = vpack.c.bf16 %v1658, %v1657
  %v1686 = vpack.c.bf16 %v1660, %v1659
  %v1687 = vpack.c.bf16 %v1662, %v1661
  %v1688 = vpack.c.bf16 %v1664, %v1663
  %v1689 = vpack.c.bf16 %v1666, %v1665
  %v1690 = vpack.c.bf16 %v1668, %v1667
  %v1691 = vpack.c.bf16 %v1670, %v1669
  %v1692 = vpack.c.bf16 %v1672, %v1671
  %v1693 = vpack.c.bf16 %v1674, %v1673
  %v1694 = vpack.c.bf16 %v1676, %v1675
  %v1695 = vpack.c.bf16 %v1678, %v1677
  %v1696 = vpack.c.bf16 %v1680, %v1679
  %1698 = vset.pattern.permute.xlu0 0
  %1699 = vperm.xlu0 %1698, %v1681
  %v1700 = vpop.permute.xlu0 %1699
  %1703 = vset.pattern.permute.xlu0 0
  %1704 = vperm.xlu0 %1703, %v1682
  %v1705 = vpop.permute.xlu0 %1704
  %1708 = vset.pattern.permute.xlu0 0
  %1709 = vperm.xlu0 %1708, %v1683
  %v1710 = vpop.permute.xlu0 %1709
  %1713 = vset.pattern.permute.xlu0 0
  %1714 = vperm.xlu0 %1713, %v1684
  %v1715 = vpop.permute.xlu0 %1714
  %1718 = vset.pattern.permute.xlu0 0
  %1719 = vperm.xlu0 %1718, %v1685
  %v1720 = vpop.permute.xlu0 %1719
  %1723 = vset.pattern.permute.xlu0 0
  %1724 = vperm.xlu0 %1723, %v1686
  %v1725 = vpop.permute.xlu0 %1724
  %1728 = vset.pattern.permute.xlu0 0
  %1729 = vperm.xlu0 %1728, %v1687
  %v1730 = vpop.permute.xlu0 %1729
  %1733 = vset.pattern.permute.xlu0 0
  %1734 = vperm.xlu0 %1733, %v1688
  %v1735 = vpop.permute.xlu0 %1734
  %1738 = vset.pattern.permute.xlu0 0
  %1739 = vperm.xlu0 %1738, %v1689
  %v1740 = vpop.permute.xlu0 %1739
  %1743 = vset.pattern.permute.xlu0 0
  %1744 = vperm.xlu0 %1743, %v1690
  %v1745 = vpop.permute.xlu0 %1744
  %1748 = vset.pattern.permute.xlu0 0
  %1749 = vperm.xlu0 %1748, %v1691
  %v1750 = vpop.permute.xlu0 %1749
  %1753 = vset.pattern.permute.xlu0 0
  %1754 = vperm.xlu0 %1753, %v1692
  %v1755 = vpop.permute.xlu0 %1754
  %1758 = vset.pattern.permute.xlu0 0
  %1759 = vperm.xlu0 %1758, %v1693
  %v1760 = vpop.permute.xlu0 %1759
  %1763 = vset.pattern.permute.xlu0 0
  %1764 = vperm.xlu0 %1763, %v1694
  %v1765 = vpop.permute.xlu0 %1764
  %1768 = vset.pattern.permute.xlu0 0
  %1769 = vperm.xlu0 %1768, %v1695
  %v1770 = vpop.permute.xlu0 %1769
  %1773 = vset.pattern.permute.xlu0 0
  %1774 = vperm.xlu0 %1773, %v1696
  %v1775 = vpop.permute.xlu0 %1774
  %v1777 = vadd.bf16 %v1617, %v1700
  %v1778 = vadd.bf16 %v1618, %v1700
  %v1779 = vadd.bf16 %v1619, %v1705
  %v1780 = vadd.bf16 %v1620, %v1705
  %v1781 = vadd.bf16 %v1621, %v1710
  %v1782 = vadd.bf16 %v1622, %v1710
  %v1783 = vadd.bf16 %v1623, %v1715
  %v1784 = vadd.bf16 %v1624, %v1715
  %v1785 = vadd.bf16 %v1625, %v1720
  %v1786 = vadd.bf16 %v1626, %v1720
  %v1787 = vadd.bf16 %v1627, %v1725
  %v1788 = vadd.bf16 %v1628, %v1725
  %v1789 = vadd.bf16 %v1629, %v1730
  %v1790 = vadd.bf16 %v1630, %v1730
  %v1791 = vadd.bf16 %v1631, %v1735
  %v1792 = vadd.bf16 %v1632, %v1735
  %v1793 = vadd.bf16 %v1633, %v1740
  %v1794 = vadd.bf16 %v1634, %v1740
  %v1795 = vadd.bf16 %v1635, %v1745
  %v1796 = vadd.bf16 %v1636, %v1745
  %v1797 = vadd.bf16 %v1637, %v1750
  %v1798 = vadd.bf16 %v1638, %v1750
  %v1799 = vadd.bf16 %v1639, %v1755
  %v1800 = vadd.bf16 %v1640, %v1755
  %v1801 = vadd.bf16 %v1641, %v1760
  %v1802 = vadd.bf16 %v1642, %v1760
  %v1803 = vadd.bf16 %v1643, %v1765
  %v1804 = vadd.bf16 %v1644, %v1765
  %v1805 = vadd.bf16 %v1645, %v1770
  %v1806 = vadd.bf16 %v1646, %v1770
  %v1807 = vadd.bf16 %v1647, %v1775
  %v1808 = vadd.bf16 %v1648, %v1775
  %v1809 = vmax.bf16 %v1777, 0
  %v1810 = vmax.bf16 %v1778, 0
  %v1811 = vmax.bf16 %v1779, 0
  %v1812 = vmax.bf16 %v1780, 0
  %v1813 = vmax.bf16 %v1781, 0
  %v1814 = vmax.bf16 %v1782, 0
  %v1815 = vmax.bf16 %v1783, 0
  %v1816 = vmax.bf16 %v1784, 0
  %v1817 = vmax.bf16 %v1785, 0
  %v1818 = vmax.bf16 %v1786, 0
  %v1819 = vmax.bf16 %v1787, 0
  %v1820 = vmax.bf16 %v1788, 0
  %v1821 = vmax.bf16 %v1789, 0
  %v1822 = vmax.bf16 %v1790, 0
  %v1823 = vmax.bf16 %v1791, 0
  %v1824 = vmax.bf16 %v1792, 0
  %v1825 = vmax.bf16 %v1793, 0
  %v1826 = vmax.bf16 %v1794, 0
  %v1827 = vmax.bf16 %v1795, 0
  %v1828 = vmax.bf16 %v1796, 0
  %v1829 = vmax.bf16 %v1797, 0
  %v1830 = vmax.bf16 %v1798, 0
  %v1831 = vmax.bf16 %v1799, 0
  %v1832 = vmax.bf16 %v1800, 0
  %v1833 = vmax.bf16 %v1801, 0
  %v1834 = vmax.bf16 %v1802, 0
  %v1835 = vmax.bf16 %v1803, 0
  %v1836 = vmax.bf16 %v1804, 0
  %v1837 = vmax.bf16 %v1805, 0
  %v1838 = vmax.bf16 %v1806, 0
  %v1839 = vmax.bf16 %v1807, 0
  %v1840 = vmax.bf16 %v1808, 0
  %v1841 = vld [vmem:[%s4] sm:$0xff]
  %v1842 = vld [vmem:[%s4 + $0x8] sm:$0xff]
  %v1843 = vld [vmem:[%s4 + $0x10] sm:$0xff]
  %v1844 = vld [vmem:[%s4 + $0x18] sm:$0xff]
  %v1845 = vld [vmem:[%s4 + $0x20] sm:$0xff]
  %v1846 = vld [vmem:[%s4 + $0x28] sm:$0xff]
  %v1847 = vld [vmem:[%s4 + $0x30] sm:$0xff]
  %v1848 = vld [vmem:[%s4 + $0x38] sm:$0xff]
  %v1857 = vunpack.c.l.b16 %v1841
  %v1858 = vunpack.c.h.b16 %v1841
  %v1859 = vunpack.c.l.b16 %v1842
  %v1860 = vunpack.c.h.b16 %v1842
  %v1861 = vunpack.c.l.b16 %v1843
  %v1862 = vunpack.c.h.b16 %v1843
  %v1863 = vunpack.c.l.b16 %v1844
  %v1864 = vunpack.c.h.b16 %v1844
  %v1865 = vunpack.c.l.b16 %v1845
  %v1866 = vunpack.c.h.b16 %v1845
  %v1867 = vunpack.c.l.b16 %v1846
  %v1868 = vunpack.c.h.b16 %v1846
  %v1869 = vunpack.c.l.b16 %v1847
  %v1870 = vunpack.c.h.b16 %v1847
  %v1871 = vunpack.c.l.b16 %v1848
  %v1872 = vunpack.c.h.b16 %v1848
  %v1873 = vpack.c.b16 %v1859, %v1857
  %v1874 = vpack.c.b16 %v1860, %v1858
  %v1875 = vpack.c.b16 %v1863, %v1861
  %v1876 = vpack.c.b16 %v1864, %v1862
  %v1877 = vpack.c.b16 %v1867, %v1865
  %v1878 = vpack.c.b16 %v1868, %v1866
  %v1879 = vpack.c.b16 %v1871, %v1869
  %v1880 = vpack.c.b16 %v1872, %v1870
  %1889 = vmatprep.subr.bf16.mxu0 %v1810
  %1890 = vmatpush1.bf16.msra.mxu0 %v1809
  %1891 = vmatprep.subr.bf16.mxu0 %v1812
  %1892 = vmatpush1.bf16.msra.mxu0 %v1811
  %1893 = vmatprep.subr.bf16.mxu0 %v1814
  %1894 = vmatpush1.bf16.msra.mxu0 %v1813
  %1895 = vmatprep.subr.bf16.mxu0 %v1816
  %1896 = vmatpush1.bf16.msra.mxu0 %v1815
  %1897 = vmatprep.subr.bf16.mxu0 %v1818
  %1898 = vmatpush1.bf16.msra.mxu0 %v1817
  %1899 = vmatprep.subr.bf16.mxu0 %v1820
  %1900 = vmatpush1.bf16.msra.mxu0 %v1819
  %1901 = vmatprep.subr.bf16.mxu0 %v1822
  %1902 = vmatpush1.bf16.msra.mxu0 %v1821
  %1903 = vmatprep.subr.bf16.mxu0 %v1824
  %1904 = vmatpush1.bf16.msra.mxu0 %v1823
  %1905 = vmatprep.subr.bf16.mxu0 %v1826
  %1906 = vmatpush1.bf16.msra.mxu0 %v1825
  %1907 = vmatprep.subr.bf16.mxu0 %v1828
  %1908 = vmatpush1.bf16.msra.mxu0 %v1827
  %1909 = vmatprep.subr.bf16.mxu0 %v1830
  %1910 = vmatpush1.bf16.msra.mxu0 %v1829
  %1911 = vmatprep.subr.bf16.mxu0 %v1832
  %1912 = vmatpush1.bf16.msra.mxu0 %v1831
  %1913 = vmatprep.subr.bf16.mxu0 %v1834
  %1914 = vmatpush1.bf16.msra.mxu0 %v1833
  %1915 = vmatprep.subr.bf16.mxu0 %v1836
  %1916 = vmatpush1.bf16.msra.mxu0 %v1835
  %1917 = vmatprep.subr.bf16.mxu0 %v1838
  %1918 = vmatpush1.bf16.msra.mxu0 %v1837
  %1919 = vmatprep.subr.bf16.mxu0 %v1840
  %1920 = vmatpush1.bf16.msra.mxu0 %v1839
  %1921 = vmatprep.mubr.bf16.mxu0 %v1874
  %1922 = vmatmul.mubr.bf16.gmra.mrb[0].mxu0 %v1873
  %v1923 = vpop.f32.mrb[0].mxu0
  %v1924 = vadd.f32 0.0, %v1923
  %v1925 = vpop.f32.mrb[0].mxu0
  %v1926 = vadd.f32 0.0, %v1925
  %v1927 = vpop.f32.mrb[0].mxu0
  %v1928 = vadd.f32 0.0, %v1927
  %v1929 = vpop.f32.mrb[0].mxu0
  %v1930 = vadd.f32 0.0, %v1929
  %1931 = vmatprep.mubr.bf16.mxu0 %v1876
  %1932 = vmatmul.mubr.bf16.gmra.mrb[0].mxu0 %v1875
  %v1933 = vpop.f32.mrb[0].mxu0
  %v1934 = vadd.f32 0.0, %v1933
  %v1935 = vpop.f32.mrb[0].mxu0
  %v1936 = vadd.f32 0.0, %v1935
  %v1937 = vpop.f32.mrb[0].mxu0
  %v1938 = vadd.f32 0.0, %v1937
  %v1939 = vpop.f32.mrb[0].mxu0
  %v1940 = vadd.f32 0.0, %v1939
  %1941 = vmatprep.mubr.bf16.mxu0 %v1878
  %1942 = vmatmul.mubr.bf16.gmra.mrb[0].mxu0 %v1877
  %v1943 = vpop.f32.mrb[0].mxu0
  %v1944 = vadd.f32 0.0, %v1943
  %v1945 = vpop.f32.mrb[0].mxu0
  %v1946 = vadd.f32 0.0, %v1945
  %v1947 = vpop.f32.mrb[0].mxu0
  %v1948 = vadd.f32 0.0, %v1947
  %v1949 = vpop.f32.mrb[0].mxu0
  %v1950 = vadd.f32 0.0, %v1949
  %1951 = vmatprep.mubr.bf16.mxu0 %v1880
  %1952 = vmatmul.mubr.bf16.gmra.mrb[0].mxu0 %v1879
  %v1953 = vpop.f32.mrb[0].mxu0
  %v1954 = vadd.f32 0.0, %v1953
  %v1955 = vpop.f32.mrb[0].mxu0
  %v1956 = vadd.f32 0.0, %v1955
  %v1957 = vpop.f32.mrb[0].mxu0
  %v1958 = vadd.f32 0.0, %v1957
  %v1959 = vpop.f32.mrb[0].mxu0
  %v1960 = vadd.f32 0.0, %v1959
  %1961 = vdwg.mxu0
  %v1962 = vpack.c.bf16 %v1928, %v1924
  %v1963 = vpack.c.bf16 %v1930, %v1926
  %v1964 = vpack.c.bf16 %v1938, %v1934
  %v1965 = vpack.c.bf16 %v1940, %v1936
  %v1966 = vpack.c.bf16 %v1948, %v1944
  %v1967 = vpack.c.bf16 %v1950, %v1946
  %v1968 = vpack.c.bf16 %v1958, %v1954
  %v1969 = vpack.c.bf16 %v1960, %v1956
  %v1970 = vld [vmem:[%s5] sm:$0xff]
  %v1971 = vld [vmem:[%s5 + $0x8] sm:$0xff]
  %v1972 = vld [vmem:[%s5 + $0x10] sm:$0xff]
  %v1973 = vld [vmem:[%s5 + $0x18] sm:$0xff]
  %v1974 = vld [vmem:[%s5 + $0x20] sm:$0xff]
  %v1975 = vld [vmem:[%s5 + $0x28] sm:$0xff]
  %v1976 = vld [vmem:[%s5 + $0x30] sm:$0xff]
  %v1977 = vld [vmem:[%s5 + $0x38] sm:$0xff]
  %v1978 = vpack.c.bf16 %v1971, %v1970
  %v1979 = vpack.c.bf16 %v1973, %v1972
  %v1980 = vpack.c.bf16 %v1975, %v1974
  %v1981 = vpack.c.bf16 %v1977, %v1976
  %1983 = vset.pattern.permute.xlu0 0
  %1984 = vperm.xlu0 %1983, %v1978
  %v1985 = vpop.permute.xlu0 %1984
  %1988 = vset.pattern.permute.xlu0 0
  %1989 = vperm.xlu0 %1988, %v1979
  %v1990 = vpop.permute.xlu0 %1989
  %1993 = vset.pattern.permute.xlu0 0
  %1994 = vperm.xlu0 %1993, %v1980
  %v1995 = vpop.permute.xlu0 %1994
  %1998 = vset.pattern.permute.xlu0 0
  %1999 = vperm.xlu0 %1998, %v1981
  %v2000 = vpop.permute.xlu0 %1999
  %v2002 = vadd.bf16 %v1962, %v1985
  %v2003 = vadd.bf16 %v1963, %v1985
  %v2004 = vadd.bf16 %v1964, %v1990
  %v2005 = vadd.bf16 %v1965, %v1990
  %v2006 = vadd.bf16 %v1966, %v1995
  %v2007 = vadd.bf16 %v1967, %v1995
  %v2008 = vadd.bf16 %v1968, %v2000
  %v2009 = vadd.bf16 %v1969, %v2000
  %v2010 = vmax.bf16 %v2002, 0
  %v2011 = vmax.bf16 %v2003, 0
  %v2012 = vmax.bf16 %v2004, 0
  %v2013 = vmax.bf16 %v2005, 0
  %v2014 = vmax.bf16 %v2006, 0
  %v2015 = vmax.bf16 %v2007, 0
  %v2016 = vmax.bf16 %v2008, 0
  %v2017 = vmax.bf16 %v2009, 0
  %v2018 = vld [vmem:[%s6] sm:$0x1]
  %v2019 = vld [vmem:[#allocation2] sm:$0x1]
  %2021 = vset.pattern.permute.xlu0 0
  %2022 = vperm.xlu0 %2021, %v2019
  %v2023 = vpop.permute.xlu0 %2022
  %v2025 = vlaneseq
  %v2026 = vshrl.u32 %v2025, 7
  %v2027 = vsub.s32 0, %v2026
  %v2028 = vrot.slane %v2023, %v2027
  %vm2029 = vcmask 523264
  %v2031 = vsel %vm2029, %v2018, 0
  %2033 = vmatprep.subr.bf16.mxu0 %v2011
  %2034 = vmatpush1.bf16.msra.mxu0 %v2010
  %2035 = vmatprep.subr.bf16.mxu0 %v2013
  %2036 = vmatpush1.bf16.msra.mxu0 %v2012
  %2037 = vmatprep.subr.bf16.mxu0 %v2015
  %2038 = vmatpush1.bf16.msra.mxu0 %v2014
  %2039 = vmatprep.subr.bf16.mxu0 %v2017
  %2040 = vmatpush1.bf16.msra.mxu0 %v2016
  %2041 = vmatprep.subr.bf16.mxu0 0
  %2042 = vmatpush1.bf16.msra.mxu0 0
  %2043 = vmatprep.subr.bf16.mxu0 0
  %2044 = vmatpush1.bf16.msra.mxu0 0
  %2045 = vmatprep.subr.bf16.mxu0 0
  %2046 = vmatpush1.bf16.msra.mxu0 0
  %2047 = vmatprep.subr.bf16.mxu0 0
  %2048 = vmatpush1.bf16.msra.mxu0 0
  %2049 = vmatprep.subr.bf16.mxu0 0
  %2050 = vmatpush1.bf16.msra.mxu0 0
  %2051 = vmatprep.subr.bf16.mxu0 0
  %2052 = vmatpush1.bf16.msra.mxu0 0
  %2053 = vmatprep.subr.bf16.mxu0 0
  %2054 = vmatpush1.bf16.msra.mxu0 0
  %2055 = vmatprep.subr.bf16.mxu0 0
  %2056 = vmatpush1.bf16.msra.mxu0 0
  %2057 = vmatprep.subr.bf16.mxu0 0
  %2058 = vmatpush1.bf16.msra.mxu0 0
  %2059 = vmatprep.subr.bf16.mxu0 0
  %2060 = vmatpush1.bf16.msra.mxu0 0
  %2061 = vmatprep.subr.bf16.mxu0 0
  %2062 = vmatpush1.bf16.msra.mxu0 0
  %2063 = vmatprep.subr.bf16.mxu0 0
  %2064 = vmatpush1.bf16.msra.mxu0 0
  %2065 = vmatprep.mubr.bf16.mxu0 0
  %2066 = vmatmul.mubr.bf16.gmra.mrb[0].mxu0 %v2031
  %v2067 = vpop.f32.mrb[0].mxu0
  %v2068 = vadd.f32 %v2028, %v2067
  %v2069 = vpop.f32.mrb[0].mxu0
  %v2070 = vadd.f32 %v2028, %v2069
  %v2071 = vpop.f32.mrb[0].mxu0
  %v2072 = vpop.f32.mrb[0].mxu0
  %2073 = vdwg.mxu0
  %v2076 = vcombine.low %v2068, %v2070
  %v2078 = vunpack.c.l.s4 1966171168
  %v2079 = vunpack.c.0.s8 %v2078
  %v2080 = vlaneseq
  %v2081 = vshrl.u32 %v2080, 7
  %v2082 = vsub.s32 %v2079, %v2081
  %v2083 = vrot.slane %v2076, %v2082
  %v2085 = vunpack.c.l.s4 1966171168
  %v2086 = vunpack.c.0.s8 %v2085
  %v2087 = vlaneseq
  %v2088 = vshrl.u32 %v2087, 7
  %v2089 = vsub.s32 %v2086, %v2088
  %v2090 = vrot.slane %v2083, %v2089
  %v2092 = vlaneseq
  %vm2093 = vcmp.ge.s32.totalorder %v2092, 0
  %vm2094 = vcmp.lt.s32.totalorder %v2092, 256
  %vm2095 = vmand %vm2093, %vm2094
  %2096 = vst.msk [vmem:[%s8] sm:$0x3] %vm2095, %v2090
  // Predicated region
  $region34: #{price_mlp_forward.1} parent=0 // pred_check
    _
  $region35: #{price_mlp_forward.1} parent=0 // pred_check_branch
    %2098 = sbr.rel (0) target = $region37
  $region36: #{price_mlp_forward.1} parent=0 // pred_region
    _
  $region37: #{price_mlp_forward.1} parent=0 // pred_fallthru
    _
  // Predicated region
  $region38: #{price_mlp_forward.1} parent=0 // pred_check
    _
  $region39: #{price_mlp_forward.1} parent=0 // pred_check_branch
    %2100 = sbr.rel (0) target = $region41
  $region40: #{price_mlp_forward.1} parent=0 // pred_region
    _
  $region41: #{price_mlp_forward.1} parent=0 // pred_fallthru
    _

</llo_original>
